<compile_context>
chip_gen: v6e
topology: v6e:2x2x1
jax: 0.10.0
libtpu: 0.0.40
codegen_flags: <defaults>
</compile_context>

<pallas_src>
import functools

import jax
import jax.numpy as jnp
from jax.experimental import pallas as pl
from jax.experimental.pallas import tpu as pltpu

# ---- model dims (small, consistent with the module) -------------------------
HIDDEN = 16       # hidden_size
INPUT = 16        # input_size (X_train.shape[1] stand-in)
OUTPUT = 2        # output_size
BATCH = 8         # batch
SEQ = 8           # seq len; must equal BATCH (torch module's broadcasting)
FC_PAD = 128      # lane-dense padded FC output width


# ---- in-kernel math helpers --------------------------------------------------
def _erf_approx(x):
    # Abramowitz & Stegun 7.1.26, |err| <= 1.5e-7.  Uses only exp / mul / add /
    # where; the divide goes to the EUP via pl.reciprocal(approx=True).
    a1, a2, a3, a4, a5 = 0.254829592, -0.284496736, 1.421413741, -1.453152027, 1.061405429
    p = 0.3275911
    ax = jnp.abs(x)
    t = pl.reciprocal(1.0 + p * ax, approx=True)
    poly = ((((a5 * t + a4) * t + a3) * t + a2) * t + a1) * t
    y = 1.0 - poly * jnp.exp(-ax * ax)
    return jnp.where(x >= 0, y, -y)


def _gelu_exact(x):
    # F.gelu default (erf-based, approximate='none')
    return 0.5 * x * (1.0 + _erf_approx(x * 0.7071067811865476))


# ---- the fused kernel --------------------------------------------------------
def bilstm_att_kernel(x_ref,            # (S*B, 2I) f32  row block k = [x_{t=k} | x_{t=S-1-k}]
                      wih_ref,          # (2I, 8H) bf16  block-diag, gate-major merged layout
                      b_ref,            # (1, 8H)  f32   merged biases (b_ih + b_hh)
                      whh_ref,          # (2H, 8H) bf16  block-diag, gate-major merged layout
                      w_att_ref,        # (1, 2H)  f32
                      b_att_ref,        # (1, 1)   f32
                      w_fc_ref,         # (2H, FC_PAD) bf16
                      b_fc_ref,         # (1, FC_PAD)  f32
                      out_ref,          # (S, FC_PAD) f32
                      asum_ref,         # VMEM (S, 2H) f32 scratch: row t = [sumB h_f(t) | sumB h_b(t)]
                      *, seq_len, batch, hidden):
    S, B, H = seq_len, batch, hidden
    H2 = 2 * H

    # Hoisted input projection for BOTH directions and all steps:
    # one lane-full (S*B, 2I) @ (2I, 8H) bf16 MXU matmul.
    xg = (jnp.dot(x_ref[...].astype(jnp.bfloat16), wih_ref[...],
                  preferred_element_type=jnp.float32)
          + b_ref[...])                                            # (S*B, 8H) f32

    whh = whh_ref[...]                                             # (2H, 8H) bf16

    h = jnp.zeros((B, H2), jnp.float32)                            # [h_fwd | h_bwd]
    c = jnp.zeros((B, H2), jnp.float32)

    # Fully-unrolled merged fwd/bwd recurrence: ONE matmul, ONE sigmoid and
    # TWO tanh per step.  Static loop indices -> static slices / stores.
    # TODO(synk): on v6e/v7x, staging whh in the MXU across all steps via
    #             pltpu.matmul_push_rhs / matmul_acc_lhs / matmul_pop would cut
    #             per-step fill latency further; kept as jnp.dot for portability.
    for k in range(S):
        gates = xg[k * B:(k + 1) * B, :] + jnp.dot(
            h.astype(jnp.bfloat16), whh, preferred_element_type=jnp.float32)  # (B, 8H)
        sig = jax.nn.sigmoid(gates[:, :3 * H2])       # i|f|o for both directions
        g = jnp.tanh(gates[:, 3 * H2:])               # cell gate, both directions
        c = sig[:, H2:2 * H2] * c + sig[:, :H2] * g
        h = sig[:, 2 * H2:3 * H2] * jnp.tanh(c)
        # Off the carried chain: per-timestep batch sums consumed by the epilogue.
        s_k = jnp.sum(h, axis=0, keepdims=True)                    # (1, 2H)
        asum_ref[k:k + 1, :H] = s_k[:, :H]            # fwd half -> row t = k
        asum_ref[S - 1 - k:S - k, H:] = s_k[:, H:]    # bwd half -> row t = S-1-k

    # hn = cat(h_n[0], h_n[1]) is exactly the final merged h (fwd t=S-1 | bwd t=0).
    # Dropout(0.5) is identity at inference.
    # TODO(synk): training-mode dropout masking not implemented (eval mode only).
    g_hn = _gelu_exact(h)                                          # (B, 2H)

    # attention_layer: N=1-output matmul replaced by VPU mul + lane reduce.
    att = (jnp.sum(g_hn * w_att_ref[...], axis=-1, keepdims=True)
           + b_att_ref[...])                                       # (B, 1)
    # softmax over dim=0 (the batch axis, exactly as the torch module does)
    att = att - jnp.max(att, axis=0, keepdims=True)
    e = jnp.exp(att)
    attn_w = e * pl.reciprocal(jnp.sum(e, axis=0, keepdims=True), approx=True)  # (B,1) == (S,1)

    # attn_output[t] = attn_w[t] * [sum_b h_fwd(t) | sum_b h_bwd(t)]   (B == S)
    a_cat = attn_w * asum_ref[...]                                 # (S, 2H)

    # Merged, lane-dense bf16 FC; padded columns sliced off in the wrapper.
    out_ref[...] = (jnp.dot(a_cat.astype(jnp.bfloat16), w_fc_ref[...],
                            preferred_element_type=jnp.float32)
                    + b_fc_ref[...])                               # (S, FC_PAD)


# ---- wrapper -----------------------------------------------------------------
def _gate_cols(w, g):
    # PyTorch gate column order is (i, f, g, o); pick gate g's H columns.
    return w[..., g * HIDDEN:(g + 1) * HIDDEN]


def _merge_dirs(w_f, w_b):
    # -> (..., 8H) gate-major across directions, merged gate order (i, f, o, g):
    #    [i_f i_b | f_f f_b | o_f o_b | g_f g_b]
    parts = []
    for g in (0, 1, 3, 2):          # i, f, o, g
        parts.append(_gate_cols(w_f, g))
        parts.append(_gate_cols(w_b, g))
    return jnp.concatenate(parts, axis=-1)


def bilstm_att_forward(x, params):
    (wih_f_t, whh_f_t, b_f, wih_b_t, whh_b_t, b_b,
     w_att_t, b_att, w_fc_t, b_fc) = params
    B, S, I = x.shape
    assert B == S, "torch module's broadcasting requires batch == seq"
    H = HIDDEN

    # Paired, time-major input rows: block k = [x_{t=k} | x_{t=S-1-k}]  -> (S*B, 2I)
    x_t = jnp.transpose(x, (1, 0, 2)).astype(jnp.float32)            # (S, B, I)
    x_pair = jnp.concatenate([x_t, x_t[::-1]], axis=-1).reshape(S * B, 2 * I)

    # Block-diagonal merged weights (bf16 MXU operands), gate-major layout.
    zero_ih = jnp.zeros_like(wih_f_t)
    wih_merged = jnp.concatenate(
        [_merge_dirs(wih_f_t, zero_ih), _merge_dirs(zero_ih, wih_b_t)],
        axis=0).astype(jnp.bfloat16)                                 # (2I, 8H)
    zero_hh = jnp.zeros_like(whh_f_t)
    whh_merged = jnp.concatenate(
        [_merge_dirs(whh_f_t, zero_hh), _merge_dirs(zero_hh, whh_b_t)],
        axis=0).astype(jnp.bfloat16)                                 # (2H, 8H)
    b_merged = _merge_dirs(b_f, b_b).astype(jnp.float32)             # (1, 8H)

    w_att_row = w_att_t.T.astype(jnp.float32)                        # (1, 2H)
    b_att_f32 = b_att.astype(jnp.float32)                            # (1, 1)

    w_fc_pad = (jnp.zeros((2 * H, FC_PAD), jnp.float32)
                .at[:, :OUTPUT].set(w_fc_t)).astype(jnp.bfloat16)    # (2H, FC_PAD)
    b_fc_pad = jnp.zeros((1, FC_PAD), jnp.float32).at[:, :OUTPUT].set(b_fc)

    kernel = functools.partial(bilstm_att_kernel, seq_len=S, batch=B, hidden=H)
    vmem = lambda: pl.BlockSpec(memory_space=pltpu.MemorySpace.VMEM)

    out_pad = pl.pallas_call(
        kernel,
        out_shape=jax.ShapeDtypeStruct((S, FC_PAD), jnp.float32),
        in_specs=[vmem() for _ in range(8)],
        out_specs=vmem(),
        scratch_shapes=[pltpu.VMEM((S, 2 * H), jnp.float32)],
    )(x_pair, wih_merged, b_merged, whh_merged,
      w_att_row, b_att_f32, w_fc_pad, b_fc_pad)

    return out_pad[:, :OUTPUT]


# ---- pure-JAX reference (mirrors the PyTorch forward exactly, all f32) ---------
def reference_forward(x, params):
    (wih_f_t, whh_f_t, b_f, wih_b_t, whh_b_t, b_b,
     w_att_t, b_att, w_fc_t, b_fc) = params
    B, S, I = x.shape
    H = HIDDEN

    def cell(x_t, h, c, wih_t, whh_t, b):
        gates = x_t @ wih_t + h @ whh_t + b
        i = jax.nn.sigmoid(gates[:, :H])
        f = jax.nn.sigmoid(gates[:, H:2 * H])
        g = jnp.tanh(gates[:, 2 * H:3 * H])
        o = jax.nn.sigmoid(gates[:, 3 * H:])
        c = f * c + i * g
        h = o * jnp.tanh(c)
        return h, c

    h = jnp.zeros((B, H)); c = jnp.zeros((B, H))
    fwd = []
    for t in range(S):
        h, c = cell(x[:, t, :], h, c, wih_f_t, whh_f_t, b_f)
        fwd.append(h)
    h_f = h

    h = jnp.zeros((B, H)); c = jnp.zeros((B, H))
    bwd = [None] * S
    for t in range(S - 1, -1, -1):
        h, c = cell(x[:, t, :], h, c, wih_b_t, whh_b_t, b_b)
        bwd[t] = h
    h_b = h

    output = jnp.stack(
        [jnp.concatenate([fwd[t], bwd[t]], axis=-1) for t in range(S)], axis=1)  # (B,S,2H)

    hn = jnp.concatenate([h_f, h_b], axis=1)
    hn = jax.nn.gelu(hn, approximate=False)
    att = hn @ w_att_t + b_att                           # (B,1)
    attn_w = jax.nn.softmax(att, axis=0)[:, :, None]     # (B,1,1)
    out_perm = jnp.transpose(output, (1, 0, 2))          # (S,B,2H)
    attn_output = jnp.sum(attn_w * out_perm, axis=1)     # (S,2H)
    return attn_output @ w_fc_t + b_fc


# ---- deterministic parameter init (PyTorch-layout, pre-transposed) -------------
def make_params(key):
    ks = jax.random.split(key, 12)

    def u(k, shape, bound):
        return jax.random.uniform(k, shape, jnp.float32, -bound, bound)

    kl = 1.0 / float(jnp.sqrt(jnp.float32(HIDDEN)))
    kd = 1.0 / float(jnp.sqrt(jnp.float32(2 * HIDDEN)))

    w_ih_f = u(ks[0], (4 * HIDDEN, INPUT), kl)
    w_hh_f = u(ks[1], (4 * HIDDEN, HIDDEN), kl)
    b_ih_f = u(ks[2], (4 * HIDDEN,), kl)
    b_hh_f = u(ks[3], (4 * HIDDEN,), kl)
    w_ih_b = u(ks[4], (4 * HIDDEN, INPUT), kl)
    w_hh_b = u(ks[5], (4 * HIDDEN, HIDDEN), kl)
    b_ih_b = u(ks[6], (4 * HIDDEN,), kl)
    b_hh_b = u(ks[7], (4 * HIDDEN,), kl)
    w_att = u(ks[8], (1, 2 * HIDDEN), kd)
    b_att = u(ks[9], (1,), kd)
    w_fc = u(ks[10], (OUTPUT, 2 * HIDDEN), kd)
    b_fc = u(ks[11], (OUTPUT,), kd)

    # pre-transposed / bias-summed, canonical PyTorch gate order (i, f, g, o)
    return (
        w_ih_f.T, w_hh_f.T, (b_ih_f + b_hh_f)[None, :],
        w_ih_b.T, w_hh_b.T, (b_ih_b + b_hh_b)[None, :],
        w_att.T, b_att[None, :],
        w_fc.T, b_fc[None, :],
    )


if __name__ == "__main__":
    key = jax.random.PRNGKey(0)
    k_x, k_p = jax.random.split(key)
    params = make_params(k_p)
    x = jax.random.normal(k_x, (BATCH, SEQ, INPUT), jnp.float32)

    out = bilstm_att_forward(x, params)
    out = jax.block_until_ready(out)

    ref = reference_forward(x, params)
    assert out.shape == (BATCH, OUTPUT)
    # tolerance accounts for bf16 MXU operands over the 8-step recurrence and the
    # final FC, the EUP approx reciprocals (softmax denom, erf poly divide), and
    # the erf polynomial approximation
    assert jnp.allclose(out, ref, atol=5e-2, rtol=5e-2), (out, ref)

    print("KERNEL_OK")
</pallas_src>

<mosaic_0001>
module attributes {stable_mosaic.version = 11 : i64} {
  func.func @bilstm_att_kernel(%arg0: memref<64x32xf32, #tpu.memory_space<vmem>>, %arg1: memref<32x128xbf16, #tpu.memory_space<vmem>>, %arg2: memref<1x128xf32, #tpu.memory_space<vmem>>, %arg3: memref<32x128xbf16, #tpu.memory_space<vmem>>, %arg4: memref<1x32xf32, #tpu.memory_space<vmem>>, %arg5: memref<1x1xf32, #tpu.memory_space<vmem>>, %arg6: memref<32x128xbf16, #tpu.memory_space<vmem>>, %arg7: memref<1x128xf32, #tpu.memory_space<vmem>>, %arg8: memref<8x128xf32, #tpu.memory_space<vmem>>, %arg9: memref<8x32xf32, #tpu.memory_space<vmem>>) attributes {dimension_semantics = [], scalar_prefetch = 0 : i64, scratch_operands = 1 : i64, tpu.core_type = #tpu.core_type<tc>} {
    %c0 = arith.constant 0 : index
    %c0_0 = arith.constant 0 : index
    %0 = vector.load %arg0[%c0, %c0_0] : memref<64x32xf32, #tpu.memory_space<vmem>>, vector<64x32xf32>
    %1 = arith.truncf %0 : vector<64x32xf32> to vector<64x32xbf16>
    %c0_1 = arith.constant 0 : index
    %c0_2 = arith.constant 0 : index
    %2 = vector.load %arg1[%c0_1, %c0_2] : memref<32x128xbf16, #tpu.memory_space<vmem>>, vector<32x128xbf16>
    %cst = arith.constant dense<0.000000e+00> : vector<64x128xf32>
    %3 = tpu.matmul %1, %2, %cst {dimension_numbers = #tpu.dot_dimension_numbers<[1], [0], [0], [1], [0, 0, 1, 1], [], []>} : vector<64x32xbf16>, vector<32x128xbf16>, vector<64x128xf32> -> vector<64x128xf32>
    %c0_3 = arith.constant 0 : index
    %c0_4 = arith.constant 0 : index
    %4 = vector.load %arg2[%c0_3, %c0_4] : memref<1x128xf32, #tpu.memory_space<vmem>>, vector<1x128xf32>
    %5 = vector.broadcast %4 : vector<1x128xf32> to vector<64x128xf32>
    %6 = arith.addf %3, %5 : vector<64x128xf32>
    %c0_5 = arith.constant 0 : index
    %c0_6 = arith.constant 0 : index
    %7 = vector.load %arg3[%c0_5, %c0_6] : memref<32x128xbf16, #tpu.memory_space<vmem>>, vector<32x128xbf16>
    %cst_7 = arith.constant 0.000000e+00 : f32
    %8 = vector.broadcast %cst_7 : f32 to vector<8x32xf32>
    %cst_8 = arith.constant 0.000000e+00 : f32
    %9 = vector.broadcast %cst_8 : f32 to vector<8x32xf32>
    %10 = vector.extract_strided_slice %6 {offsets = [0, 0], sizes = [8, 128], strides = [1, 1]} : vector<64x128xf32> to vector<8x128xf32>
    %11 = arith.truncf %8 : vector<8x32xf32> to vector<8x32xbf16>
    %cst_9 = arith.constant dense<0.000000e+00> : vector<8x128xf32>
    %12 = tpu.matmul %11, %7, %cst_9 {dimension_numbers = #tpu.dot_dimension_numbers<[1], [0], [0], [1], [0, 0, 1, 1], [], []>} : vector<8x32xbf16>, vector<32x128xbf16>, vector<8x128xf32> -> vector<8x128xf32>
    %13 = arith.addf %10, %12 : vector<8x128xf32>
    %14 = vector.extract_strided_slice %13 {offsets = [0, 0], sizes = [8, 96], strides = [1, 1]} : vector<8x128xf32> to vector<8x96xf32>
    %15 = arith.negf %14 : vector<8x96xf32>
    %16 = math.exp %15 : vector<8x96xf32>
    %cst_10 = arith.constant 1.000000e+00 : f32
    %17 = vector.broadcast %cst_10 : f32 to vector<8x96xf32>
    %18 = arith.addf %17, %16 : vector<8x96xf32>
    %19 = arith.divf %17, %18 : vector<8x96xf32>
    %20 = vector.extract_strided_slice %13 {offsets = [0, 96], sizes = [8, 32], strides = [1, 1]} : vector<8x128xf32> to vector<8x32xf32>
    %21 = math.tanh %20 : vector<8x32xf32>
    %22 = vector.extract_strided_slice %19 {offsets = [0, 32], sizes = [8, 32], strides = [1, 1]} : vector<8x96xf32> to vector<8x32xf32>
    %23 = arith.mulf %22, %9 : vector<8x32xf32>
    %24 = vector.extract_strided_slice %19 {offsets = [0, 0], sizes = [8, 32], strides = [1, 1]} : vector<8x96xf32> to vector<8x32xf32>
    %25 = arith.mulf %24, %21 : vector<8x32xf32>
    %26 = arith.addf %23, %25 : vector<8x32xf32>
    %27 = vector.extract_strided_slice %19 {offsets = [0, 64], sizes = [8, 32], strides = [1, 1]} : vector<8x96xf32> to vector<8x32xf32>
    %28 = math.tanh %26 : vector<8x32xf32>
    %29 = arith.mulf %27, %28 : vector<8x32xf32>
    %cst_11 = arith.constant dense<0.000000e+00> : vector<32xf32>
    %30 = vector.multi_reduction <add>, %29, %cst_11 [0] : vector<8x32xf32> to vector<32xf32>
    %31 = vector.shape_cast %30 : vector<32xf32> to vector<1x32xf32>
    %32 = vector.extract_strided_slice %31 {offsets = [0, 0], sizes = [1, 16], strides = [1, 1]} : vector<1x32xf32> to vector<1x16xf32>
    %c0_12 = arith.constant 0 : index
    %c0_13 = arith.constant 0 : index
    %33 = vector.load %arg9[%c0_12, %c0_13] : memref<8x32xf32, #tpu.memory_space<vmem>>, vector<1x16xf32>
    tpu.vector_store %arg9[%c0_12, %c0_13], %32 {strides = array<i32>} : memref<8x32xf32, #tpu.memory_space<vmem>>, vector<1x16xf32>,
    %34 = vector.extract_strided_slice %31 {offsets = [0, 16], sizes = [1, 16], strides = [1, 1]} : vector<1x32xf32> to vector<1x16xf32>
    %c7 = arith.constant 7 : index
    %c16 = arith.constant 16 : index
    %35 = vector.load %arg9[%c7, %c16] : memref<8x32xf32, #tpu.memory_space<vmem>>, vector<1x16xf32>
    tpu.vector_store %arg9[%c7, %c16], %34 {strides = array<i32>} : memref<8x32xf32, #tpu.memory_space<vmem>>, vector<1x16xf32>,
    %36 = vector.extract_strided_slice %6 {offsets = [8, 0], sizes = [8, 128], strides = [1, 1]} : vector<64x128xf32> to vector<8x128xf32>
    %37 = arith.truncf %29 : vector<8x32xf32> to vector<8x32xbf16>
    %cst_14 = arith.constant dense<0.000000e+00> : vector<8x128xf32>
    %38 = tpu.matmul %37, %7, %cst_14 {dimension_numbers = #tpu.dot_dimension_numbers<[1], [0], [0], [1], [0, 0, 1, 1], [], []>} : vector<8x32xbf16>, vector<32x128xbf16>, vector<8x128xf32> -> vector<8x128xf32>
    %39 = arith.addf %36, %38 : vector<8x128xf32>
    %40 = vector.extract_strided_slice %39 {offsets = [0, 0], sizes = [8, 96], strides = [1, 1]} : vector<8x128xf32> to vector<8x96xf32>
    %41 = arith.negf %40 : vector<8x96xf32>
    %42 = math.exp %41 : vector<8x96xf32>
    %cst_15 = arith.constant 1.000000e+00 : f32
    %43 = vector.broadcast %cst_15 : f32 to vector<8x96xf32>
    %44 = arith.addf %43, %42 : vector<8x96xf32>
    %45 = arith.divf %43, %44 : vector<8x96xf32>
    %46 = vector.extract_strided_slice %39 {offsets = [0, 96], sizes = [8, 32], strides = [1, 1]} : vector<8x128xf32> to vector<8x32xf32>
    %47 = math.tanh %46 : vector<8x32xf32>
    %48 = vector.extract_strided_slice %45 {offsets = [0, 32], sizes = [8, 32], strides = [1, 1]} : vector<8x96xf32> to vector<8x32xf32>
    %49 = arith.mulf %48, %26 : vector<8x32xf32>
    %50 = vector.extract_strided_slice %45 {offsets = [0, 0], sizes = [8, 32], strides = [1, 1]} : vector<8x96xf32> to vector<8x32xf32>
    %51 = arith.mulf %50, %47 : vector<8x32xf32>
    %52 = arith.addf %49, %51 : vector<8x32xf32>
    %53 = vector.extract_strided_slice %45 {offsets = [0, 64], sizes = [8, 32], strides = [1, 1]} : vector<8x96xf32> to vector<8x32xf32>
    %54 = math.tanh %52 : vector<8x32xf32>
    %55 = arith.mulf %53, %54 : vector<8x32xf32>
    %cst_16 = arith.constant dense<0.000000e+00> : vector<32xf32>
    %56 = vector.multi_reduction <add>, %55, %cst_16 [0] : vector<8x32xf32> to vector<32xf32>
    %57 = vector.shape_cast %56 : vector<32xf32> to vector<1x32xf32>
    %58 = vector.extract_strided_slice %57 {offsets = [0, 0], sizes = [1, 16], strides = [1, 1]} : vector<1x32xf32> to vector<1x16xf32>
    %c1 = arith.constant 1 : index
    %c0_17 = arith.constant 0 : index
    %59 = vector.load %arg9[%c1, %c0_17] : memref<8x32xf32, #tpu.memory_space<vmem>>, vector<1x16xf32>
    tpu.vector_store %arg9[%c1, %c0_17], %58 {strides = array<i32>} : memref<8x32xf32, #tpu.memory_space<vmem>>, vector<1x16xf32>,
    %60 = vector.extract_strided_slice %57 {offsets = [0, 16], sizes = [1, 16], strides = [1, 1]} : vector<1x32xf32> to vector<1x16xf32>
    %c6 = arith.constant 6 : index
    %c16_18 = arith.constant 16 : index
    %61 = vector.load %arg9[%c6, %c16_18] : memref<8x32xf32, #tpu.memory_space<vmem>>, vector<1x16xf32>
    tpu.vector_store %arg9[%c6, %c16_18], %60 {strides = array<i32>} : memref<8x32xf32, #tpu.memory_space<vmem>>, vector<1x16xf32>,
    %62 = vector.extract_strided_slice %6 {offsets = [16, 0], sizes = [8, 128], strides = [1, 1]} : vector<64x128xf32> to vector<8x128xf32>
    %63 = arith.truncf %55 : vector<8x32xf32> to vector<8x32xbf16>
    %cst_19 = arith.constant dense<0.000000e+00> : vector<8x128xf32>
    %64 = tpu.matmul %63, %7, %cst_19 {dimension_numbers = #tpu.dot_dimension_numbers<[1], [0], [0], [1], [0, 0, 1, 1], [], []>} : vector<8x32xbf16>, vector<32x128xbf16>, vector<8x128xf32> -> vector<8x128xf32>
    %65 = arith.addf %62, %64 : vector<8x128xf32>
    %66 = vector.extract_strided_slice %65 {offsets = [0, 0], sizes = [8, 96], strides = [1, 1]} : vector<8x128xf32> to vector<8x96xf32>
    %67 = arith.negf %66 : vector<8x96xf32>
    %68 = math.exp %67 : vector<8x96xf32>
    %cst_20 = arith.constant 1.000000e+00 : f32
    %69 = vector.broadcast %cst_20 : f32 to vector<8x96xf32>
    %70 = arith.addf %69, %68 : vector<8x96xf32>
    %71 = arith.divf %69, %70 : vector<8x96xf32>
    %72 = vector.extract_strided_slice %65 {offsets = [0, 96], sizes = [8, 32], strides = [1, 1]} : vector<8x128xf32> to vector<8x32xf32>
    %73 = math.tanh %72 : vector<8x32xf32>
    %74 = vector.extract_strided_slice %71 {offsets = [0, 32], sizes = [8, 32], strides = [1, 1]} : vector<8x96xf32> to vector<8x32xf32>
    %75 = arith.mulf %74, %52 : vector<8x32xf32>
    %76 = vector.extract_strided_slice %71 {offsets = [0, 0], sizes = [8, 32], strides = [1, 1]} : vector<8x96xf32> to vector<8x32xf32>
    %77 = arith.mulf %76, %73 : vector<8x32xf32>
    %78 = arith.addf %75, %77 : vector<8x32xf32>
    %79 = vector.extract_strided_slice %71 {offsets = [0, 64], sizes = [8, 32], strides = [1, 1]} : vector<8x96xf32> to vector<8x32xf32>
    %80 = math.tanh %78 : vector<8x32xf32>
    %81 = arith.mulf %79, %80 : vector<8x32xf32>
    %cst_21 = arith.constant dense<0.000000e+00> : vector<32xf32>
    %82 = vector.multi_reduction <add>, %81, %cst_21 [0] : vector<8x32xf32> to vector<32xf32>
    %83 = vector.shape_cast %82 : vector<32xf32> to vector<1x32xf32>
    %84 = vector.extract_strided_slice %83 {offsets = [0, 0], sizes = [1, 16], strides = [1, 1]} : vector<1x32xf32> to vector<1x16xf32>
    %c2 = arith.constant 2 : index
    %c0_22 = arith.constant 0 : index
    %85 = vector.load %arg9[%c2, %c0_22] : memref<8x32xf32, #tpu.memory_space<vmem>>, vector<1x16xf32>
    tpu.vector_store %arg9[%c2, %c0_22], %84 {strides = array<i32>} : memref<8x32xf32, #tpu.memory_space<vmem>>, vector<1x16xf32>,
    %86 = vector.extract_strided_slice %83 {offsets = [0, 16], sizes = [1, 16], strides = [1, 1]} : vector<1x32xf32> to vector<1x16xf32>
    %c5 = arith.constant 5 : index
    %c16_23 = arith.constant 16 : index
    %87 = vector.load %arg9[%c5, %c16_23] : memref<8x32xf32, #tpu.memory_space<vmem>>, vector<1x16xf32>
    tpu.vector_store %arg9[%c5, %c16_23], %86 {strides = array<i32>} : memref<8x32xf32, #tpu.memory_space<vmem>>, vector<1x16xf32>,
    %88 = vector.extract_strided_slice %6 {offsets = [24, 0], sizes = [8, 128], strides = [1, 1]} : vector<64x128xf32> to vector<8x128xf32>
    %89 = arith.truncf %81 : vector<8x32xf32> to vector<8x32xbf16>
    %cst_24 = arith.constant dense<0.000000e+00> : vector<8x128xf32>
    %90 = tpu.matmul %89, %7, %cst_24 {dimension_numbers = #tpu.dot_dimension_numbers<[1], [0], [0], [1], [0, 0, 1, 1], [], []>} : vector<8x32xbf16>, vector<32x128xbf16>, vector<8x128xf32> -> vector<8x128xf32>
    %91 = arith.addf %88, %90 : vector<8x128xf32>
    %92 = vector.extract_strided_slice %91 {offsets = [0, 0], sizes = [8, 96], strides = [1, 1]} : vector<8x128xf32> to vector<8x96xf32>
    %93 = arith.negf %92 : vector<8x96xf32>
    %94 = math.exp %93 : vector<8x96xf32>
    %cst_25 = arith.constant 1.000000e+00 : f32
    %95 = vector.broadcast %cst_25 : f32 to vector<8x96xf32>
    %96 = arith.addf %95, %94 : vector<8x96xf32>
    %97 = arith.divf %95, %96 : vector<8x96xf32>
    %98 = vector.extract_strided_slice %91 {offsets = [0, 96], sizes = [8, 32], strides = [1, 1]} : vector<8x128xf32> to vector<8x32xf32>
    %99 = math.tanh %98 : vector<8x32xf32>
    %100 = vector.extract_strided_slice %97 {offsets = [0, 32], sizes = [8, 32], strides = [1, 1]} : vector<8x96xf32> to vector<8x32xf32>
    %101 = arith.mulf %100, %78 : vector<8x32xf32>
    %102 = vector.extract_strided_slice %97 {offsets = [0, 0], sizes = [8, 32], strides = [1, 1]} : vector<8x96xf32> to vector<8x32xf32>
    %103 = arith.mulf %102, %99 : vector<8x32xf32>
    %104 = arith.addf %101, %103 : vector<8x32xf32>
    %105 = vector.extract_strided_slice %97 {offsets = [0, 64], sizes = [8, 32], strides = [1, 1]} : vector<8x96xf32> to vector<8x32xf32>
    %106 = math.tanh %104 : vector<8x32xf32>
    %107 = arith.mulf %105, %106 : vector<8x32xf32>
    %cst_26 = arith.constant dense<0.000000e+00> : vector<32xf32>
    %108 = vector.multi_reduction <add>, %107, %cst_26 [0] : vector<8x32xf32> to vector<32xf32>
    %109 = vector.shape_cast %108 : vector<32xf32> to vector<1x32xf32>
    %110 = vector.extract_strided_slice %109 {offsets = [0, 0], sizes = [1, 16], strides = [1, 1]} : vector<1x32xf32> to vector<1x16xf32>
    %c3 = arith.constant 3 : index
    %c0_27 = arith.constant 0 : index
    %111 = vector.load %arg9[%c3, %c0_27] : memref<8x32xf32, #tpu.memory_space<vmem>>, vector<1x16xf32>
    tpu.vector_store %arg9[%c3, %c0_27], %110 {strides = array<i32>} : memref<8x32xf32, #tpu.memory_space<vmem>>, vector<1x16xf32>,
    %112 = vector.extract_strided_slice %109 {offsets = [0, 16], sizes = [1, 16], strides = [1, 1]} : vector<1x32xf32> to vector<1x16xf32>
    %c4 = arith.constant 4 : index
    %c16_28 = arith.constant 16 : index
    %113 = vector.load %arg9[%c4, %c16_28] : memref<8x32xf32, #tpu.memory_space<vmem>>, vector<1x16xf32>
    tpu.vector_store %arg9[%c4, %c16_28], %112 {strides = array<i32>} : memref<8x32xf32, #tpu.memory_space<vmem>>, vector<1x16xf32>,
    %114 = vector.extract_strided_slice %6 {offsets = [32, 0], sizes = [8, 128], strides = [1, 1]} : vector<64x128xf32> to vector<8x128xf32>
    %115 = arith.truncf %107 : vector<8x32xf32> to vector<8x32xbf16>
    %cst_29 = arith.constant dense<0.000000e+00> : vector<8x128xf32>
    %116 = tpu.matmul %115, %7, %cst_29 {dimension_numbers = #tpu.dot_dimension_numbers<[1], [0], [0], [1], [0, 0, 1, 1], [], []>} : vector<8x32xbf16>, vector<32x128xbf16>, vector<8x128xf32> -> vector<8x128xf32>
    %117 = arith.addf %114, %116 : vector<8x128xf32>
    %118 = vector.extract_strided_slice %117 {offsets = [0, 0], sizes = [8, 96], strides = [1, 1]} : vector<8x128xf32> to vector<8x96xf32>
    %119 = arith.negf %118 : vector<8x96xf32>
    %120 = math.exp %119 : vector<8x96xf32>
    %cst_30 = arith.constant 1.000000e+00 : f32
    %121 = vector.broadcast %cst_30 : f32 to vector<8x96xf32>
    %122 = arith.addf %121, %120 : vector<8x96xf32>
    %123 = arith.divf %121, %122 : vector<8x96xf32>
    %124 = vector.extract_strided_slice %117 {offsets = [0, 96], sizes = [8, 32], strides = [1, 1]} : vector<8x128xf32> to vector<8x32xf32>
    %125 = math.tanh %124 : vector<8x32xf32>
    %126 = vector.extract_strided_slice %123 {offsets = [0, 32], sizes = [8, 32], strides = [1, 1]} : vector<8x96xf32> to vector<8x32xf32>
    %127 = arith.mulf %126, %104 : vector<8x32xf32>
    %128 = vector.extract_strided_slice %123 {offsets = [0, 0], sizes = [8, 32], strides = [1, 1]} : vector<8x96xf32> to vector<8x32xf32>
    %129 = arith.mulf %128, %125 : vector<8x32xf32>
    %130 = arith.addf %127, %129 : vector<8x32xf32>
    %131 = vector.extract_strided_slice %123 {offsets = [0, 64], sizes = [8, 32], strides = [1, 1]} : vector<8x96xf32> to vector<8x32xf32>
    %132 = math.tanh %130 : vector<8x32xf32>
    %133 = arith.mulf %131, %132 : vector<8x32xf32>
    %cst_31 = arith.constant dense<0.000000e+00> : vector<32xf32>
    %134 = vector.multi_reduction <add>, %133, %cst_31 [0] : vector<8x32xf32> to vector<32xf32>
    %135 = vector.shape_cast %134 : vector<32xf32> to vector<1x32xf32>
    %136 = vector.extract_strided_slice %135 {offsets = [0, 0], sizes = [1, 16], strides = [1, 1]} : vector<1x32xf32> to vector<1x16xf32>
    %c4_32 = arith.constant 4 : index
    %c0_33 = arith.constant 0 : index
    %137 = vector.load %arg9[%c4_32, %c0_33] : memref<8x32xf32, #tpu.memory_space<vmem>>, vector<1x16xf32>
    tpu.vector_store %arg9[%c4_32, %c0_33], %136 {strides = array<i32>} : memref<8x32xf32, #tpu.memory_space<vmem>>, vector<1x16xf32>,
    %138 = vector.extract_strided_slice %135 {offsets = [0, 16], sizes = [1, 16], strides = [1, 1]} : vector<1x32xf32> to vector<1x16xf32>
    %c3_34 = arith.constant 3 : index
    %c16_35 = arith.constant 16 : index
    %139 = vector.load %arg9[%c3_34, %c16_35] : memref<8x32xf32, #tpu.memory_space<vmem>>, vector<1x16xf32>
    tpu.vector_store %arg9[%c3_34, %c16_35], %138 {strides = array<i32>} : memref<8x32xf32, #tpu.memory_space<vmem>>, vector<1x16xf32>,
    %140 = vector.extract_strided_slice %6 {offsets = [40, 0], sizes = [8, 128], strides = [1, 1]} : vector<64x128xf32> to vector<8x128xf32>
    %141 = arith.truncf %133 : vector<8x32xf32> to vector<8x32xbf16>
    %cst_36 = arith.constant dense<0.000000e+00> : vector<8x128xf32>
    %142 = tpu.matmul %141, %7, %cst_36 {dimension_numbers = #tpu.dot_dimension_numbers<[1], [0], [0], [1], [0, 0, 1, 1], [], []>} : vector<8x32xbf16>, vector<32x128xbf16>, vector<8x128xf32> -> vector<8x128xf32>
    %143 = arith.addf %140, %142 : vector<8x128xf32>
    %144 = vector.extract_strided_slice %143 {offsets = [0, 0], sizes = [8, 96], strides = [1, 1]} : vector<8x128xf32> to vector<8x96xf32>
    %145 = arith.negf %144 : vector<8x96xf32>
    %146 = math.exp %145 : vector<8x96xf32>
    %cst_37 = arith.constant 1.000000e+00 : f32
    %147 = vector.broadcast %cst_37 : f32 to vector<8x96xf32>
    %148 = arith.addf %147, %146 : vector<8x96xf32>
    %149 = arith.divf %147, %148 : vector<8x96xf32>
    %150 = vector.extract_strided_slice %143 {offsets = [0, 96], sizes = [8, 32], strides = [1, 1]} : vector<8x128xf32> to vector<8x32xf32>
    %151 = math.tanh %150 : vector<8x32xf32>
    %152 = vector.extract_strided_slice %149 {offsets = [0, 32], sizes = [8, 32], strides = [1, 1]} : vector<8x96xf32> to vector<8x32xf32>
    %153 = arith.mulf %152, %130 : vector<8x32xf32>
    %154 = vector.extract_strided_slice %149 {offsets = [0, 0], sizes = [8, 32], strides = [1, 1]} : vector<8x96xf32> to vector<8x32xf32>
    %155 = arith.mulf %154, %151 : vector<8x32xf32>
    %156 = arith.addf %153, %155 : vector<8x32xf32>
    %157 = vector.extract_strided_slice %149 {offsets = [0, 64], sizes = [8, 32], strides = [1, 1]} : vector<8x96xf32> to vector<8x32xf32>
    %158 = math.tanh %156 : vector<8x32xf32>
    %159 = arith.mulf %157, %158 : vector<8x32xf32>
    %cst_38 = arith.constant dense<0.000000e+00> : vector<32xf32>
    %160 = vector.multi_reduction <add>, %159, %cst_38 [0] : vector<8x32xf32> to vector<32xf32>
    %161 = vector.shape_cast %160 : vector<32xf32> to vector<1x32xf32>
    %162 = vector.extract_strided_slice %161 {offsets = [0, 0], sizes = [1, 16], strides = [1, 1]} : vector<1x32xf32> to vector<1x16xf32>
    %c5_39 = arith.constant 5 : index
    %c0_40 = arith.constant 0 : index
    %163 = vector.load %arg9[%c5_39, %c0_40] : memref<8x32xf32, #tpu.memory_space<vmem>>, vector<1x16xf32>
    tpu.vector_store %arg9[%c5_39, %c0_40], %162 {strides = array<i32>} : memref<8x32xf32, #tpu.memory_space<vmem>>, vector<1x16xf32>,
    %164 = vector.extract_strided_slice %161 {offsets = [0, 16], sizes = [1, 16], strides = [1, 1]} : vector<1x32xf32> to vector<1x16xf32>
    %c2_41 = arith.constant 2 : index
    %c16_42 = arith.constant 16 : index
    %165 = vector.load %arg9[%c2_41, %c16_42] : memref<8x32xf32, #tpu.memory_space<vmem>>, vector<1x16xf32>
    tpu.vector_store %arg9[%c2_41, %c16_42], %164 {strides = array<i32>} : memref<8x32xf32, #tpu.memory_space<vmem>>, vector<1x16xf32>,
    %166 = vector.extract_strided_slice %6 {offsets = [48, 0], sizes = [8, 128], strides = [1, 1]} : vector<64x128xf32> to vector<8x128xf32>
    %167 = arith.truncf %159 : vector<8x32xf32> to vector<8x32xbf16>
    %cst_43 = arith.constant dense<0.000000e+00> : vector<8x128xf32>
    %168 = tpu.matmul %167, %7, %cst_43 {dimension_numbers = #tpu.dot_dimension_numbers<[1], [0], [0], [1], [0, 0, 1, 1], [], []>} : vector<8x32xbf16>, vector<32x128xbf16>, vector<8x128xf32> -> vector<8x128xf32>
    %169 = arith.addf %166, %168 : vector<8x128xf32>
    %170 = vector.extract_strided_slice %169 {offsets = [0, 0], sizes = [8, 96], strides = [1, 1]} : vector<8x128xf32> to vector<8x96xf32>
    %171 = arith.negf %170 : vector<8x96xf32>
    %172 = math.exp %171 : vector<8x96xf32>
    %cst_44 = arith.constant 1.000000e+00 : f32
    %173 = vector.broadcast %cst_44 : f32 to vector<8x96xf32>
    %174 = arith.addf %173, %172 : vector<8x96xf32>
    %175 = arith.divf %173, %174 : vector<8x96xf32>
    %176 = vector.extract_strided_slice %169 {offsets = [0, 96], sizes = [8, 32], strides = [1, 1]} : vector<8x128xf32> to vector<8x32xf32>
    %177 = math.tanh %176 : vector<8x32xf32>
    %178 = vector.extract_strided_slice %175 {offsets = [0, 32], sizes = [8, 32], strides = [1, 1]} : vector<8x96xf32> to vector<8x32xf32>
    %179 = arith.mulf %178, %156 : vector<8x32xf32>
    %180 = vector.extract_strided_slice %175 {offsets = [0, 0], sizes = [8, 32], strides = [1, 1]} : vector<8x96xf32> to vector<8x32xf32>
    %181 = arith.mulf %180, %177 : vector<8x32xf32>
    %182 = arith.addf %179, %181 : vector<8x32xf32>
    %183 = vector.extract_strided_slice %175 {offsets = [0, 64], sizes = [8, 32], strides = [1, 1]} : vector<8x96xf32> to vector<8x32xf32>
    %184 = math.tanh %182 : vector<8x32xf32>
    %185 = arith.mulf %183, %184 : vector<8x32xf32>
    %cst_45 = arith.constant dense<0.000000e+00> : vector<32xf32>
    %186 = vector.multi_reduction <add>, %185, %cst_45 [0] : vector<8x32xf32> to vector<32xf32>
    %187 = vector.shape_cast %186 : vector<32xf32> to vector<1x32xf32>
    %188 = vector.extract_strided_slice %187 {offsets = [0, 0], sizes = [1, 16], strides = [1, 1]} : vector<1x32xf32> to vector<1x16xf32>
    %c6_46 = arith.constant 6 : index
    %c0_47 = arith.constant 0 : index
    %189 = vector.load %arg9[%c6_46, %c0_47] : memref<8x32xf32, #tpu.memory_space<vmem>>, vector<1x16xf32>
    tpu.vector_store %arg9[%c6_46, %c0_47], %188 {strides = array<i32>} : memref<8x32xf32, #tpu.memory_space<vmem>>, vector<1x16xf32>,
    %190 = vector.extract_strided_slice %187 {offsets = [0, 16], sizes = [1, 16], strides = [1, 1]} : vector<1x32xf32> to vector<1x16xf32>
    %c1_48 = arith.constant 1 : index
    %c16_49 = arith.constant 16 : index
    %191 = vector.load %arg9[%c1_48, %c16_49] : memref<8x32xf32, #tpu.memory_space<vmem>>, vector<1x16xf32>
    tpu.vector_store %arg9[%c1_48, %c16_49], %190 {strides = array<i32>} : memref<8x32xf32, #tpu.memory_space<vmem>>, vector<1x16xf32>,
    %192 = vector.extract_strided_slice %6 {offsets = [56, 0], sizes = [8, 128], strides = [1, 1]} : vector<64x128xf32> to vector<8x128xf32>
    %193 = arith.truncf %185 : vector<8x32xf32> to vector<8x32xbf16>
    %cst_50 = arith.constant dense<0.000000e+00> : vector<8x128xf32>
    %194 = tpu.matmul %193, %7, %cst_50 {dimension_numbers = #tpu.dot_dimension_numbers<[1], [0], [0], [1], [0, 0, 1, 1], [], []>} : vector<8x32xbf16>, vector<32x128xbf16>, vector<8x128xf32> -> vector<8x128xf32>
    %195 = arith.addf %192, %194 : vector<8x128xf32>
    %196 = vector.extract_strided_slice %195 {offsets = [0, 0], sizes = [8, 96], strides = [1, 1]} : vector<8x128xf32> to vector<8x96xf32>
    %197 = arith.negf %196 : vector<8x96xf32>
    %198 = math.exp %197 : vector<8x96xf32>
    %cst_51 = arith.constant 1.000000e+00 : f32
    %199 = vector.broadcast %cst_51 : f32 to vector<8x96xf32>
    %200 = arith.addf %199, %198 : vector<8x96xf32>
    %201 = arith.divf %199, %200 : vector<8x96xf32>
    %202 = vector.extract_strided_slice %195 {offsets = [0, 96], sizes = [8, 32], strides = [1, 1]} : vector<8x128xf32> to vector<8x32xf32>
    %203 = math.tanh %202 : vector<8x32xf32>
    %204 = vector.extract_strided_slice %201 {offsets = [0, 32], sizes = [8, 32], strides = [1, 1]} : vector<8x96xf32> to vector<8x32xf32>
    %205 = arith.mulf %204, %182 : vector<8x32xf32>
    %206 = vector.extract_strided_slice %201 {offsets = [0, 0], sizes = [8, 32], strides = [1, 1]} : vector<8x96xf32> to vector<8x32xf32>
    %207 = arith.mulf %206, %203 : vector<8x32xf32>
    %208 = arith.addf %205, %207 : vector<8x32xf32>
    %209 = vector.extract_strided_slice %201 {offsets = [0, 64], sizes = [8, 32], strides = [1, 1]} : vector<8x96xf32> to vector<8x32xf32>
    %210 = math.tanh %208 : vector<8x32xf32>
    %211 = arith.mulf %209, %210 : vector<8x32xf32>
    %cst_52 = arith.constant dense<0.000000e+00> : vector<32xf32>
    %212 = vector.multi_reduction <add>, %211, %cst_52 [0] : vector<8x32xf32> to vector<32xf32>
    %213 = vector.shape_cast %212 : vector<32xf32> to vector<1x32xf32>
    %214 = vector.extract_strided_slice %213 {offsets = [0, 0], sizes = [1, 16], strides = [1, 1]} : vector<1x32xf32> to vector<1x16xf32>
    %c7_53 = arith.constant 7 : index
    %c0_54 = arith.constant 0 : index
    %215 = vector.load %arg9[%c7_53, %c0_54] : memref<8x32xf32, #tpu.memory_space<vmem>>, vector<1x16xf32>
    tpu.vector_store %arg9[%c7_53, %c0_54], %214 {strides = array<i32>} : memref<8x32xf32, #tpu.memory_space<vmem>>, vector<1x16xf32>,
    %216 = vector.extract_strided_slice %213 {offsets = [0, 16], sizes = [1, 16], strides = [1, 1]} : vector<1x32xf32> to vector<1x16xf32>
    %c0_55 = arith.constant 0 : index
    %c16_56 = arith.constant 16 : index
    %217 = vector.load %arg9[%c0_55, %c16_56] : memref<8x32xf32, #tpu.memory_space<vmem>>, vector<1x16xf32>
    tpu.vector_store %arg9[%c0_55, %c16_56], %216 {strides = array<i32>} : memref<8x32xf32, #tpu.memory_space<vmem>>, vector<1x16xf32>,
    %cst_57 = arith.constant 5.000000e-01 : f32
    %218 = vector.broadcast %cst_57 : f32 to vector<8x32xf32>
    %219 = arith.mulf %218, %211 : vector<8x32xf32>
    %cst_58 = arith.constant 0.707106769 : f32
    %220 = vector.broadcast %cst_58 : f32 to vector<8x32xf32>
    %221 = arith.mulf %211, %220 : vector<8x32xf32>
    %222 = math.absf %221 : vector<8x32xf32>
    %cst_59 = arith.constant 0.327591091 : f32
    %223 = vector.broadcast %cst_59 : f32 to vector<8x32xf32>
    %224 = arith.mulf %223, %222 : vector<8x32xf32>
    %cst_60 = arith.constant 1.000000e+00 : f32
    %225 = vector.broadcast %cst_60 : f32 to vector<8x32xf32>
    %226 = arith.addf %225, %224 : vector<8x32xf32>
    %227 = tpu.reciprocal %226 {approx = true} : vector<8x32xf32> -> vector<8x32xf32>
    %cst_61 = arith.constant 1.06140542 : f32
    %228 = vector.broadcast %cst_61 : f32 to vector<8x32xf32>
    %229 = arith.mulf %228, %227 : vector<8x32xf32>
    %cst_62 = arith.constant -1.45315206 : f32
    %230 = vector.broadcast %cst_62 : f32 to vector<8x32xf32>
    %231 = arith.addf %229, %230 : vector<8x32xf32>
    %232 = arith.mulf %231, %227 : vector<8x32xf32>
    %cst_63 = arith.constant 1.42141378 : f32
    %233 = vector.broadcast %cst_63 : f32 to vector<8x32xf32>
    %234 = arith.addf %232, %233 : vector<8x32xf32>
    %235 = arith.mulf %234, %227 : vector<8x32xf32>
    %cst_64 = arith.constant -0.284496725 : f32
    %236 = vector.broadcast %cst_64 : f32 to vector<8x32xf32>
    %237 = arith.addf %235, %236 : vector<8x32xf32>
    %238 = arith.mulf %237, %227 : vector<8x32xf32>
    %cst_65 = arith.constant 0.254829586 : f32
    %239 = vector.broadcast %cst_65 : f32 to vector<8x32xf32>
    %240 = arith.addf %238, %239 : vector<8x32xf32>
    %241 = arith.mulf %240, %227 : vector<8x32xf32>
    %cst_66 = arith.constant 0.000000e+00 : f32
    %242 = vector.broadcast %cst_66 : f32 to vector<8x32xf32>
    %243 = arith.subf %242, %222 : vector<8x32xf32>
    %244 = arith.mulf %243, %222 : vector<8x32xf32>
    %245 = math.exp %244 : vector<8x32xf32>
    %246 = arith.mulf %241, %245 : vector<8x32xf32>
    %cst_67 = arith.constant 1.000000e+00 : f32
    %247 = vector.broadcast %cst_67 : f32 to vector<8x32xf32>
    %248 = arith.subf %247, %246 : vector<8x32xf32>
    %cst_68 = arith.constant 0.000000e+00 : f32
    %249 = vector.broadcast %cst_68 : f32 to vector<8x32xf32>
    %250 = arith.cmpf oge, %221, %249 : vector<8x32xf32>
    %cst_69 = arith.constant 0.000000e+00 : f32
    %251 = vector.broadcast %cst_69 : f32 to vector<8x32xf32>
    %252 = arith.subf %251, %248 : vector<8x32xf32>
    %253 = arith.select %250, %248, %252 : vector<8x32xi1>, vector<8x32xf32>
    %cst_70 = arith.constant 1.000000e+00 : f32
    %254 = vector.broadcast %cst_70 : f32 to vector<8x32xf32>
    %255 = arith.addf %254, %253 : vector<8x32xf32>
    %256 = arith.mulf %219, %255 : vector<8x32xf32>
    %c0_71 = arith.constant 0 : index
    %c0_72 = arith.constant 0 : index
    %257 = vector.load %arg4[%c0_71, %c0_72] : memref<1x32xf32, #tpu.memory_space<vmem>>, vector<1x32xf32>
    %258 = vector.broadcast %257 : vector<1x32xf32> to vector<8x32xf32>
    %259 = arith.mulf %256, %258 : vector<8x32xf32>
    %cst_73 = arith.constant dense<0.000000e+00> : vector<8xf32>
    %260 = vector.multi_reduction <add>, %259, %cst_73 [1] : vector<8x32xf32> to vector<8xf32>
    %261 = vector.shape_cast %260 : vector<8xf32> to vector<8x1xf32>
    %c0_74 = arith.constant 0 : index
    %c0_75 = arith.constant 0 : index
    %262 = vector.load %arg5[%c0_74, %c0_75] : memref<1x1xf32, #tpu.memory_space<vmem>>, vector<1x1xf32>
    %263 = vector.broadcast %262 : vector<1x1xf32> to vector<8x1xf32>
    %264 = arith.addf %261, %263 : vector<8x1xf32>
    %cst_76 = arith.constant dense<0xFF800000> : vector<1xf32>
    %265 = vector.multi_reduction <maximumf>, %264, %cst_76 [0] : vector<8x1xf32> to vector<1xf32>
    %266 = vector.shape_cast %265 : vector<1xf32> to vector<1x1xf32>
    %267 = vector.broadcast %266 : vector<1x1xf32> to vector<8x1xf32>
    %268 = arith.subf %264, %267 : vector<8x1xf32>
    %269 = math.exp %268 : vector<8x1xf32>
    %cst_77 = arith.constant dense<0.000000e+00> : vector<1xf32>
    %270 = vector.multi_reduction <add>, %269, %cst_77 [0] : vector<8x1xf32> to vector<1xf32>
    %271 = vector.shape_cast %270 : vector<1xf32> to vector<1x1xf32>
    %272 = tpu.reciprocal %271 {approx = true} : vector<1x1xf32> -> vector<1x1xf32>
    %273 = vector.broadcast %272 : vector<1x1xf32> to vector<8x1xf32>
    %274 = arith.mulf %269, %273 : vector<8x1xf32>
    %c0_78 = arith.constant 0 : index
    %c0_79 = arith.constant 0 : index
    %275 = vector.load %arg9[%c0_78, %c0_79] : memref<8x32xf32, #tpu.memory_space<vmem>>, vector<8x32xf32>
    %276 = vector.broadcast %274 : vector<8x1xf32> to vector<8x32xf32>
    %277 = arith.mulf %276, %275 : vector<8x32xf32>
    %278 = arith.truncf %277 : vector<8x32xf32> to vector<8x32xbf16>
    %c0_80 = arith.constant 0 : index
    %c0_81 = arith.constant 0 : index
    %279 = vector.load %arg6[%c0_80, %c0_81] : memref<32x128xbf16, #tpu.memory_space<vmem>>, vector<32x128xbf16>
    %cst_82 = arith.constant dense<0.000000e+00> : vector<8x128xf32>
    %280 = tpu.matmul %278, %279, %cst_82 {dimension_numbers = #tpu.dot_dimension_numbers<[1], [0], [0], [1], [0, 0, 1, 1], [], []>} : vector<8x32xbf16>, vector<32x128xbf16>, vector<8x128xf32> -> vector<8x128xf32>
    %c0_83 = arith.constant 0 : index
    %c0_84 = arith.constant 0 : index
    %281 = vector.load %arg7[%c0_83, %c0_84] : memref<1x128xf32, #tpu.memory_space<vmem>>, vector<1x128xf32>
    %282 = vector.broadcast %281 : vector<1x128xf32> to vector<8x128xf32>
    %283 = arith.addf %280, %282 : vector<8x128xf32>
    %c0_85 = arith.constant 0 : index
    %c0_86 = arith.constant 0 : index
    %284 = vector.load %arg8[%c0_85, %c0_86] : memref<8x128xf32, #tpu.memory_space<vmem>>, vector<8x128xf32>
    tpu.vector_store %arg8[%c0_85, %c0_86], %283 {strides = array<i32>} : memref<8x128xf32, #tpu.memory_space<vmem>>, vector<8x128xf32>,
    return
  }
}

</mosaic_0001>

<llo_original>
// kernel: tpu_custom_call.1
$region0: #{tpu_custom_call.1}
  #allocation0 [shape = 'u32[]', space=smem, size = 0x4, offset = 0x4, fixed_abs, tag = 'smem constant byte address 0x4 - core index']
  #allocation1 [shape = 'u32[144,128]{1,0:T(1,128)}', space=vmem, size = 0x12000, scoped, tag = 'internal scratch']
  #allocation2 [shape = 'f32[8,32]{1,0:T(8,128)}', space=vmem, size = 0x1000, scoped, tag = 'scratch operand']
  #allocation3 [shape = 'f32[1,1]{1,0:T(1,128)S(1)}', space=vmem, size = 0x200, scoped, tag = 'scoped memory for tpu_custom_call.1']
  %s0 = inlined_call_operand.vmem [shape: f32[64,32], index: 0, kind: input, shape index: {}]
  %s1 = inlined_call_operand.vmem [shape: bf16[32,128], index: 1, kind: input, shape index: {}]
  %s2 = inlined_call_operand.vmem [shape: f32[1,128], index: 2, kind: input, shape index: {}]
  %s3 = inlined_call_operand.vmem [shape: bf16[32,128], index: 3, kind: input, shape index: {}]
  %s4 = inlined_call_operand.vmem [shape: f32[1,32], index: 4, kind: input, shape index: {}]
  %s5 = inlined_call_operand.<no memory space> [shape: f32[1,1], index: 5, kind: input, shape index: {}]
  %s6 = inlined_call_operand.vmem [shape: bf16[32,128], index: 6, kind: input, shape index: {}]
  %s7 = inlined_call_operand.vmem [shape: f32[1,128], index: 7, kind: input, shape index: {}]
  %s8 = inlined_call_operand.hbm [shape: f32[8,128], index: 8, kind: output, shape index: {}]
  %s9 = sld [smem:[#allocation0]]
  $region42: #{tpu_custom_call.1} parent=0
    _
  %s11 = ssub.s32 1, %s9
  %s12 = scalar_select 0, %s11, %s9
  %v13 = vstv %s5
  %14 = vst [vmem:[#allocation3] sm:$0x1] %v13
  $region1: #{tpu_custom_call.1} parent=0
    #allocation4 [shape = 'u8[4096]{0}', space=vmem, size = 0x1000, scoped, tag = 'output window, operand 0, single buffered']
    #allocation5 [shape = 's32[1]{0}', space=sflag, size = 0x4, scoped, tag = 'scoped memory for tpu_custom_call.1']
    %15 = vsyncpa [#allocation5], 0
    // Predicated region
    $region2: #{tpu_custom_call.1} parent=1 // pred_check
      _
    $region3: #{tpu_custom_call.1} parent=1 // pred_check_branch
      %17 = sbr.rel (0) target = $region5
    $region4: #{tpu_custom_call.1} parent=1 // pred_region
      _
    $region5: #{tpu_custom_call.1} parent=1 // pred_fallthru
      _
    // Predicated region
    $region6: #{tpu_custom_call.1} parent=1 // pred_check
      _
    $region7: #{tpu_custom_call.1} parent=1 // pred_check_branch
      %19 = sbr.rel (0) target = $region9
    $region8: #{tpu_custom_call.1} parent=1 // pred_region
      _
    $region9: #{tpu_custom_call.1} parent=1 // pred_fallthru
      _
    // Predicated region
    $region10: #{tpu_custom_call.1} parent=1 // pred_check
      _
    $region11: #{tpu_custom_call.1} parent=1 // pred_check_branch
      %21 = sbr.rel (0) target = $region13
    $region12: #{tpu_custom_call.1} parent=1 // pred_region
      _
    $region13: #{tpu_custom_call.1} parent=1 // pred_fallthru
      _
    // Predicated region
    $region14: #{tpu_custom_call.1} parent=1 // pred_check
      _
    $region15: #{tpu_custom_call.1} parent=1 // pred_check_branch
      %23 = sbr.rel (0) target = $region17
    $region16: #{tpu_custom_call.1} parent=1 // pred_region
      _
    $region17: #{tpu_custom_call.1} parent=1 // pred_fallthru
      _
    // Predicated region
    $region18: #{tpu_custom_call.1} parent=1 // pred_check
      _
    $region19: #{tpu_custom_call.1} parent=1 // pred_check_branch
      %25 = sbr.rel (0) target = $region21
    $region20: #{tpu_custom_call.1} parent=1 // pred_region
      _
    $region21: #{tpu_custom_call.1} parent=1 // pred_fallthru
      _
    // Predicated region
    $region22: #{tpu_custom_call.1} parent=1 // pred_check
      _
    $region23: #{tpu_custom_call.1} parent=1 // pred_check_branch
      %27 = sbr.rel (0) target = $region25
    $region24: #{tpu_custom_call.1} parent=1 // pred_region
      _
    $region25: #{tpu_custom_call.1} parent=1 // pred_fallthru
      _
    // Predicated region
    $region26: #{tpu_custom_call.1} parent=1 // pred_check
      _
    $region27: #{tpu_custom_call.1} parent=1 // pred_check_branch
      %29 = sbr.rel (0) target = $region29
    $region28: #{tpu_custom_call.1} parent=1 // pred_region
      _
    $region29: #{tpu_custom_call.1} parent=1 // pred_fallthru
      _
    // Predicated region
    $region30: #{tpu_custom_call.1} parent=1 // pred_check
      _
    $region31: #{tpu_custom_call.1} parent=1 // pred_check_branch
      %31 = sbr.rel (0) target = $region33
    $region32: #{tpu_custom_call.1} parent=1 // pred_region
      _
    $region33: #{tpu_custom_call.1} parent=1 // pred_fallthru
      _
    %v33 = vld [vmem:[%s0] sm:$0xff]
    %v34 = vld [vmem:[%s0 + $0x8] sm:$0xff]
    %v35 = vld [vmem:[%s0 + $0x10] sm:$0xff]
    %v36 = vld [vmem:[%s0 + $0x18] sm:$0xff]
    %v37 = vld [vmem:[%s0 + $0x20] sm:$0xff]
    %v38 = vld [vmem:[%s0 + $0x28] sm:$0xff]
    %v39 = vld [vmem:[%s0 + $0x30] sm:$0xff]
    %v40 = vld [vmem:[%s0 + $0x38] sm:$0xff]
    %v41 = vpack.c.bf16 %v34, %v33
    %v42 = vpack.c.bf16 %v36, %v35
    %v43 = vpack.c.bf16 %v38, %v37
    %v44 = vpack.c.bf16 %v40, %v39
    %v45 = vld [vmem:[%s1] sm:$0xf]
    %v46 = vld [vmem:[%s1 + $0x4] sm:$0xf]
    %v47 = vld [vmem:[%s1 + $0x8] sm:$0xf]
    %v48 = vld [vmem:[%s1 + $0xc] sm:$0xf]
    %v49 = vld [vmem:[%s2] sm:$0x1]
    %v51 = vlaneseq
    %v52 = vshrl.u32 %v51, 7
    %v53 = vsub.s32 0, %v52
    %v54 = vrot.slane %v49, %v53
    %v60 = vunpack.c.l.b16 %v45
    %v61 = vunpack.c.l.b16 %v46
    %v62 = vunpack.c.l.b16 %v47
    %v63 = vunpack.c.l.b16 %v48
    %v64 = vpack.c.b16 %v61, %v60
    %v65 = vpack.c.b16 %v63, %v62
    %vm68 = vcmask 261120
    %v70 = vsel %vm68, %v41, 0
    %v73 = vsel %vm68, %v42, 0
    %v76 = vsel %vm68, %v43, 0
    %v79 = vsel %vm68, %v44, 0
    %81 = vmatprep.subr.bf16.mxu0 0
    %82 = vmatpush1.bf16.msra.mxu0 0
    %83 = vmatprep.subr.bf16.mxu0 0
    %84 = vmatpush1.bf16.msra.mxu0 0
    %85 = vmatprep.subr.bf16.mxu0 0
    %86 = vmatpush1.bf16.msra.mxu0 0
    %87 = vmatprep.subr.bf16.mxu0 0
    %88 = vmatpush1.bf16.msra.mxu0 0
    %89 = vmatprep.subr.bf16.mxu0 0
    %90 = vmatpush1.bf16.msra.mxu0 0
    %91 = vmatprep.subr.bf16.mxu0 0
    %92 = vmatpush1.bf16.msra.mxu0 0
    %93 = vmatprep.subr.bf16.mxu0 0
    %94 = vmatpush1.bf16.msra.mxu0 %v65
    %95 = vmatprep.subr.bf16.mxu0 0
    %96 = vmatpush1.bf16.msra.mxu0 %v64
    %97 = vmatprep.subr.bf16.mxu0 0
    %98 = vmatpush2.bf16.msra.mxu0 0
    %99 = vmatprep.subr.bf16.mxu0 0
    %100 = vmatpush2.bf16.msra.mxu0 0
    %101 = vmatprep.subr.bf16.mxu0 0
    %102 = vmatpush2.bf16.msra.mxu0 0
    %103 = vmatprep.subr.bf16.mxu0 0
    %104 = vmatpush2.bf16.msra.mxu0 0
    %105 = vmatprep.subr.bf16.mxu0 0
    %106 = vmatpush2.bf16.msra.mxu0 0
    %107 = vmatprep.subr.bf16.mxu0 0
    %108 = vmatpush2.bf16.msra.mxu0 0
    %109 = vmatprep.subr.bf16.mxu0 0
    %110 = vmatpush2.bf16.msra.mxu0 0
    %111 = vmatprep.subr.bf16.mxu0 0
    %112 = vmatpush2.bf16.msra.mxu0 0
    %113 = vmatprep.mubr.bf16.mxu0 0
    %114 = vmatmul.mubr.bf16.gmra.mxu0 %v70
    %v115 = vpop.f32.mrf.mxu0
    %v116 = vadd.f32 %v54, %v115
    %v117 = vpop.f32.mrf.mxu0
    %v118 = vpop.f32.mrf.mxu0
    %v119 = vadd.f32 %v54, %v118
    %v120 = vpop.f32.mrf.mxu0
    %121 = vmatprep.mubr.bf16.mxu0 0
    %122 = vmatmul.mubr.bf16.gmra.mxu0 %v73
    %v123 = vpop.f32.mrf.mxu0
    %v124 = vadd.f32 %v54, %v123
    %v125 = vpop.f32.mrf.mxu0
    %v126 = vpop.f32.mrf.mxu0
    %v127 = vadd.f32 %v54, %v126
    %v128 = vpop.f32.mrf.mxu0
    %129 = vmatprep.mubr.bf16.mxu0 0
    %130 = vmatmul.mubr.bf16.gmra.mxu0 %v76
    %v131 = vpop.f32.mrf.mxu0
    %v132 = vadd.f32 %v54, %v131
    %v133 = vpop.f32.mrf.mxu0
    %v134 = vpop.f32.mrf.mxu0
    %v135 = vadd.f32 %v54, %v134
    %v136 = vpop.f32.mrf.mxu0
    %137 = vmatprep.mubr.bf16.mxu0 0
    %138 = vmatmul.mubr.bf16.gmra.mxu0 %v79
    %v139 = vpop.f32.mrf.mxu0
    %v140 = vadd.f32 %v54, %v139
    %v141 = vpop.f32.mrf.mxu0
    %v142 = vpop.f32.mrf.mxu0
    %v143 = vadd.f32 %v54, %v142
    %v144 = vpop.f32.mrf.mxu0
    %145 = vdwg.mxu0
    %v146 = vld [vmem:[%s3] sm:$0xf]
    %v147 = vld [vmem:[%s3 + $0x4] sm:$0xf]
    %v148 = vld [vmem:[%s3 + $0x8] sm:$0xf]
    %v149 = vld [vmem:[%s3 + $0xc] sm:$0xf]
    %v154 = vunpack.c.l.b16 %v146
    %v155 = vunpack.c.l.b16 %v147
    %v156 = vunpack.c.l.b16 %v148
    %v157 = vunpack.c.l.b16 %v149
    %v158 = vpack.c.b16 %v155, %v154
    %v159 = vpack.c.b16 %v157, %v156
    %v163 = vsel %vm68, 0, 0
    %165 = vmatprep.subr.bf16.mxu0 0
    %166 = vmatpush1.bf16.msra.mxu0 0
    %167 = vmatprep.subr.bf16.mxu0 0
    %168 = vmatpush1.bf16.msra.mxu0 0
    %169 = vmatprep.subr.bf16.mxu0 0
    %170 = vmatpush1.bf16.msra.mxu0 0
    %171 = vmatprep.subr.bf16.mxu0 0
    %172 = vmatpush1.bf16.msra.mxu0 0
    %173 = vmatprep.subr.bf16.mxu0 0
    %174 = vmatpush1.bf16.msra.mxu0 0
    %175 = vmatprep.subr.bf16.mxu0 0
    %176 = vmatpush1.bf16.msra.mxu0 0
    %177 = vmatprep.subr.bf16.mxu0 0
    %178 = vmatpush1.bf16.msra.mxu0 %v159
    %179 = vmatprep.subr.bf16.mxu0 0
    %180 = vmatpush1.bf16.msra.mxu0 %v158
    %181 = vmatprep.subr.bf16.mxu0 0
    %182 = vmatpush2.bf16.msra.mxu0 0
    %183 = vmatprep.subr.bf16.mxu0 0
    %184 = vmatpush2.bf16.msra.mxu0 0
    %185 = vmatprep.subr.bf16.mxu0 0
    %186 = vmatpush2.bf16.msra.mxu0 0
    %187 = vmatprep.subr.bf16.mxu0 0
    %188 = vmatpush2.bf16.msra.mxu0 0
    %189 = vmatprep.subr.bf16.mxu0 0
    %190 = vmatpush2.bf16.msra.mxu0 0
    %191 = vmatprep.subr.bf16.mxu0 0
    %192 = vmatpush2.bf16.msra.mxu0 0
    %193 = vmatprep.subr.bf16.mxu0 0
    %194 = vmatpush2.bf16.msra.mxu0 0
    %195 = vmatprep.subr.bf16.mxu0 0
    %196 = vmatpush2.bf16.msra.mxu0 0
    %197 = vmatprep.mubr.bf16.mxu0 0
    %198 = vmatmul.mubr.bf16.gmra.mxu0 %v163
    %v199 = vpop.f32.mrf.mxu0
    %v200 = vadd.f32 0.0, %v199
    %v201 = vpop.f32.mrf.mxu0
    %v202 = vpop.f32.mrf.mxu0
    %v203 = vpop.f32.mrf.mxu0
    %204 = vdwg.mxu0
    %v205 = vadd.f32 %v116, %v200
    %v206 = vxor.u32 %v205, 2147483648
    %v207 = vmul.f32 %v206, 1.442695
    %v208 = vpow.pop %v207
    %v209 = vadd.f32 %v208, 1.0
    %v210 = vrcp.pop %v209
    %v211 = vmul.f32 1.0, %v210
    %v212 = vtanh.pop %v205
    %v213 = vmul.f32 %v211, 0.0
    %215 = vrot.lane.b32.xlu0 %v212, 32
    %v216 = vpop.permute.xlu0 %215
    %v218 = vmul.f32 %v211, %v216
    %220 = vrot.lane.b32.xlu0 %v218, 32
    %v221 = vpop.permute.xlu0 %220
    %v223 = vadd.f32 %v213, %v221
    %v224 = vtanh.pop %v223
    %226 = vrot.lane.b32.xlu0 %v224, 32
    %v227 = vpop.permute.xlu0 %226
    %v229 = vmul.f32 %v211, %v227
    %vm230 = vcmask 785920
    %v231 = vsel %vm230, %v229, 0.0
    %v232 = vrot.slane %v231, 4
    %v233 = vadd.f32 %v231, %v232
    %v234 = vrot.slane %v233, 2
    %v235 = vadd.f32 %v233, %v234
    %v236 = vrot.slane %v235, 1
    %v237 = vadd.f32 %v235, %v236
    %239 = vrot.lane.b32.xlu0 %v237, 64
    %v240 = vpop.permute.xlu0 %239
    %vm242 = vcmask 122880
    %243 = vst.msk [vmem:[#allocation2] sm:$0x1] %vm242, %v240
    %vm244 = vcmask 254080
    %245 = vst.msk [vmem:[#allocation2 + $0x7] sm:$0x1] %vm244, %v240
    %v246 = vpack.c.bf16 %v229, %v229
    %248 = vrot.lane.b32.xlu0 %v246, 64
    %v249 = vpop.permute.xlu0 %248
    %v251 = vsel %vm68, %v249, 0
    %253 = vmatprep.subr.bf16.mxu0 0
    %254 = vmatpush1.bf16.msra.mxu0 0
    %255 = vmatprep.subr.bf16.mxu0 0
    %256 = vmatpush1.bf16.msra.mxu0 0
    %257 = vmatprep.subr.bf16.mxu0 0
    %258 = vmatpush1.bf16.msra.mxu0 0
    %259 = vmatprep.subr.bf16.mxu0 0
    %260 = vmatpush1.bf16.msra.mxu0 0
    %261 = vmatprep.subr.bf16.mxu0 0
    %262 = vmatpush1.bf16.msra.mxu0 0
    %263 = vmatprep.subr.bf16.mxu0 0
    %264 = vmatpush1.bf16.msra.mxu0 0
    %265 = vmatprep.subr.bf16.mxu0 0
    %266 = vmatpush1.bf16.msra.mxu0 %v159
    %267 = vmatprep.subr.bf16.mxu0 0
    %268 = vmatpush1.bf16.msra.mxu0 %v158
    %269 = vmatprep.subr.bf16.mxu0 0
    %270 = vmatpush2.bf16.msra.mxu0 0
    %271 = vmatprep.subr.bf16.mxu0 0
    %272 = vmatpush2.bf16.msra.mxu0 0
    %273 = vmatprep.subr.bf16.mxu0 0
    %274 = vmatpush2.bf16.msra.mxu0 0
    %275 = vmatprep.subr.bf16.mxu0 0
    %276 = vmatpush2.bf16.msra.mxu0 0
    %277 = vmatprep.subr.bf16.mxu0 0
    %278 = vmatpush2.bf16.msra.mxu0 0
    %279 = vmatprep.subr.bf16.mxu0 0
    %280 = vmatpush2.bf16.msra.mxu0 0
    %281 = vmatprep.subr.bf16.mxu0 0
    %282 = vmatpush2.bf16.msra.mxu0 0
    %283 = vmatprep.subr.bf16.mxu0 0
    %284 = vmatpush2.bf16.msra.mxu0 0
    %285 = vmatprep.mubr.bf16.mxu0 0
    %286 = vmatmul.mubr.bf16.gmra.mxu0 %v251
    %v287 = vpop.f32.mrf.mxu0
    %v288 = vadd.f32 0.0, %v287
    %v289 = vpop.f32.mrf.mxu0
    %v290 = vpop.f32.mrf.mxu0
    %v291 = vpop.f32.mrf.mxu0
    %292 = vdwg.mxu0
    %v293 = vadd.f32 %v119, %v288
    %v294 = vxor.u32 %v293, 2147483648
    %v295 = vmul.f32 %v294, 1.442695
    %v296 = vpow.pop %v295
    %v297 = vadd.f32 %v296, 1.0
    %v298 = vrcp.pop %v297
    %v299 = vmul.f32 1.0, %v298
    %v300 = vtanh.pop %v293
    %v301 = vmul.f32 %v299, %v223
    %303 = vrot.lane.b32.xlu0 %v300, 32
    %v304 = vpop.permute.xlu0 %303
    %v306 = vmul.f32 %v299, %v304
    %308 = vrot.lane.b32.xlu0 %v306, 32
    %v309 = vpop.permute.xlu0 %308
    %v311 = vadd.f32 %v301, %v309
    %v312 = vtanh.pop %v311
    %314 = vrot.lane.b32.xlu0 %v312, 32
    %v315 = vpop.permute.xlu0 %314
    %v317 = vmul.f32 %v299, %v315
    %v318 = vsel %vm230, %v317, 0.0
    %v319 = vrot.slane %v318, 4
    %v320 = vadd.f32 %v318, %v319
    %v321 = vrot.slane %v320, 2
    %v322 = vadd.f32 %v320, %v321
    %v323 = vrot.slane %v322, 1
    %v324 = vadd.f32 %v322, %v323
    %326 = vrot.lane.b32.xlu0 %v324, 64
    %v327 = vpop.permute.xlu0 %326
    %329 = vst.msk [vmem:[#allocation2 + $0x1] sm:$0x1] %vm242, %v327
    %330 = vst.msk [vmem:[#allocation2 + $0x6] sm:$0x1] %vm244, %v327
    %v331 = vpack.c.bf16 %v317, %v317
    %333 = vrot.lane.b32.xlu0 %v331, 64
    %v334 = vpop.permute.xlu0 %333
    %v336 = vsel %vm68, %v334, 0
    %338 = vmatprep.subr.bf16.mxu0 0
    %339 = vmatpush1.bf16.msra.mxu0 0
    %340 = vmatprep.subr.bf16.mxu0 0
    %341 = vmatpush1.bf16.msra.mxu0 0
    %342 = vmatprep.subr.bf16.mxu0 0
    %343 = vmatpush1.bf16.msra.mxu0 0
    %344 = vmatprep.subr.bf16.mxu0 0
    %345 = vmatpush1.bf16.msra.mxu0 0
    %346 = vmatprep.subr.bf16.mxu0 0
    %347 = vmatpush1.bf16.msra.mxu0 0
    %348 = vmatprep.subr.bf16.mxu0 0
    %349 = vmatpush1.bf16.msra.mxu0 0
    %350 = vmatprep.subr.bf16.mxu0 0
    %351 = vmatpush1.bf16.msra.mxu0 %v159
    %352 = vmatprep.subr.bf16.mxu0 0
    %353 = vmatpush1.bf16.msra.mxu0 %v158
    %354 = vmatprep.subr.bf16.mxu0 0
    %355 = vmatpush2.bf16.msra.mxu0 0
    %356 = vmatprep.subr.bf16.mxu0 0
    %357 = vmatpush2.bf16.msra.mxu0 0
    %358 = vmatprep.subr.bf16.mxu0 0
    %359 = vmatpush2.bf16.msra.mxu0 0
    %360 = vmatprep.subr.bf16.mxu0 0
    %361 = vmatpush2.bf16.msra.mxu0 0
    %362 = vmatprep.subr.bf16.mxu0 0
    %363 = vmatpush2.bf16.msra.mxu0 0
    %364 = vmatprep.subr.bf16.mxu0 0
    %365 = vmatpush2.bf16.msra.mxu0 0
    %366 = vmatprep.subr.bf16.mxu0 0
    %367 = vmatpush2.bf16.msra.mxu0 0
    %368 = vmatprep.subr.bf16.mxu0 0
    %369 = vmatpush2.bf16.msra.mxu0 0
    %370 = vmatprep.mubr.bf16.mxu0 0
    %371 = vmatmul.mubr.bf16.gmra.mxu0 %v336
    %v372 = vpop.f32.mrf.mxu0
    %v373 = vadd.f32 0.0, %v372
    %v374 = vpop.f32.mrf.mxu0
    %v375 = vpop.f32.mrf.mxu0
    %v376 = vpop.f32.mrf.mxu0
    %377 = vdwg.mxu0
    %v378 = vadd.f32 %v124, %v373
    %v379 = vxor.u32 %v378, 2147483648
    %v380 = vmul.f32 %v379, 1.442695
    %v381 = vpow.pop %v380
    %v382 = vadd.f32 %v381, 1.0
    %v383 = vrcp.pop %v382
    %v384 = vmul.f32 1.0, %v383
    %v385 = vtanh.pop %v378
    %v386 = vmul.f32 %v384, %v311
    %388 = vrot.lane.b32.xlu0 %v385, 32
    %v389 = vpop.permute.xlu0 %388
    %v391 = vmul.f32 %v384, %v389
    %393 = vrot.lane.b32.xlu0 %v391, 32
    %v394 = vpop.permute.xlu0 %393
    %v396 = vadd.f32 %v386, %v394
    %v397 = vtanh.pop %v396
    %399 = vrot.lane.b32.xlu0 %v397, 32
    %v400 = vpop.permute.xlu0 %399
    %v402 = vmul.f32 %v384, %v400
    %v403 = vsel %vm230, %v402, 0.0
    %v404 = vrot.slane %v403, 4
    %v405 = vadd.f32 %v403, %v404
    %v406 = vrot.slane %v405, 2
    %v407 = vadd.f32 %v405, %v406
    %v408 = vrot.slane %v407, 1
    %v409 = vadd.f32 %v407, %v408
    %411 = vrot.lane.b32.xlu0 %v409, 64
    %v412 = vpop.permute.xlu0 %411
    %414 = vst.msk [vmem:[#allocation2 + $0x2] sm:$0x1] %vm242, %v412
    %415 = vst.msk [vmem:[#allocation2 + $0x5] sm:$0x1] %vm244, %v412
    %v416 = vpack.c.bf16 %v402, %v402
    %418 = vrot.lane.b32.xlu0 %v416, 64
    %v419 = vpop.permute.xlu0 %418
    %v421 = vsel %vm68, %v419, 0
    %423 = vmatprep.subr.bf16.mxu0 0
    %424 = vmatpush1.bf16.msra.mxu0 0
    %425 = vmatprep.subr.bf16.mxu0 0
    %426 = vmatpush1.bf16.msra.mxu0 0
    %427 = vmatprep.subr.bf16.mxu0 0
    %428 = vmatpush1.bf16.msra.mxu0 0
    %429 = vmatprep.subr.bf16.mxu0 0
    %430 = vmatpush1.bf16.msra.mxu0 0
    %431 = vmatprep.subr.bf16.mxu0 0
    %432 = vmatpush1.bf16.msra.mxu0 0
    %433 = vmatprep.subr.bf16.mxu0 0
    %434 = vmatpush1.bf16.msra.mxu0 0
    %435 = vmatprep.subr.bf16.mxu0 0
    %436 = vmatpush1.bf16.msra.mxu0 %v159
    %437 = vmatprep.subr.bf16.mxu0 0
    %438 = vmatpush1.bf16.msra.mxu0 %v158
    %439 = vmatprep.subr.bf16.mxu0 0
    %440 = vmatpush2.bf16.msra.mxu0 0
    %441 = vmatprep.subr.bf16.mxu0 0
    %442 = vmatpush2.bf16.msra.mxu0 0
    %443 = vmatprep.subr.bf16.mxu0 0
    %444 = vmatpush2.bf16.msra.mxu0 0
    %445 = vmatprep.subr.bf16.mxu0 0
    %446 = vmatpush2.bf16.msra.mxu0 0
    %447 = vmatprep.subr.bf16.mxu0 0
    %448 = vmatpush2.bf16.msra.mxu0 0
    %449 = vmatprep.subr.bf16.mxu0 0
    %450 = vmatpush2.bf16.msra.mxu0 0
    %451 = vmatprep.subr.bf16.mxu0 0
    %452 = vmatpush2.bf16.msra.mxu0 0
    %453 = vmatprep.subr.bf16.mxu0 0
    %454 = vmatpush2.bf16.msra.mxu0 0
    %455 = vmatprep.mubr.bf16.mxu0 0
    %456 = vmatmul.mubr.bf16.gmra.mxu0 %v421
    %v457 = vpop.f32.mrf.mxu0
    %v458 = vadd.f32 0.0, %v457
    %v459 = vpop.f32.mrf.mxu0
    %v460 = vpop.f32.mrf.mxu0
    %v461 = vpop.f32.mrf.mxu0
    %462 = vdwg.mxu0
    %v463 = vadd.f32 %v127, %v458
    %v464 = vxor.u32 %v463, 2147483648
    %v465 = vmul.f32 %v464, 1.442695
    %v466 = vpow.pop %v465
    %v467 = vadd.f32 %v466, 1.0
    %v468 = vrcp.pop %v467
    %v469 = vmul.f32 1.0, %v468
    %v470 = vtanh.pop %v463
    %v471 = vmul.f32 %v469, %v396
    %473 = vrot.lane.b32.xlu0 %v470, 32
    %v474 = vpop.permute.xlu0 %473
    %v476 = vmul.f32 %v469, %v474
    %478 = vrot.lane.b32.xlu0 %v476, 32
    %v479 = vpop.permute.xlu0 %478
    %v481 = vadd.f32 %v471, %v479
    %v482 = vtanh.pop %v481
    %484 = vrot.lane.b32.xlu0 %v482, 32
    %v485 = vpop.permute.xlu0 %484
    %v487 = vmul.f32 %v469, %v485
    %v488 = vsel %vm230, %v487, 0.0
    %v489 = vrot.slane %v488, 4
    %v490 = vadd.f32 %v488, %v489
    %v491 = vrot.slane %v490, 2
    %v492 = vadd.f32 %v490, %v491
    %v493 = vrot.slane %v492, 1
    %v494 = vadd.f32 %v492, %v493
    %496 = vrot.lane.b32.xlu0 %v494, 64
    %v497 = vpop.permute.xlu0 %496
    %499 = vst.msk [vmem:[#allocation2 + $0x3] sm:$0x1] %vm242, %v497
    %500 = vst.msk [vmem:[#allocation2 + $0x4] sm:$0x1] %vm244, %v497
    %v501 = vpack.c.bf16 %v487, %v487
    %503 = vrot.lane.b32.xlu0 %v501, 64
    %v504 = vpop.permute.xlu0 %503
    %v506 = vsel %vm68, %v504, 0
    %508 = vmatprep.subr.bf16.mxu0 0
    %509 = vmatpush1.bf16.msra.mxu0 0
    %510 = vmatprep.subr.bf16.mxu0 0
    %511 = vmatpush1.bf16.msra.mxu0 0
    %512 = vmatprep.subr.bf16.mxu0 0
    %513 = vmatpush1.bf16.msra.mxu0 0
    %514 = vmatprep.subr.bf16.mxu0 0
    %515 = vmatpush1.bf16.msra.mxu0 0
    %516 = vmatprep.subr.bf16.mxu0 0
    %517 = vmatpush1.bf16.msra.mxu0 0
    %518 = vmatprep.subr.bf16.mxu0 0
    %519 = vmatpush1.bf16.msra.mxu0 0
    %520 = vmatprep.subr.bf16.mxu0 0
    %521 = vmatpush1.bf16.msra.mxu0 %v159
    %522 = vmatprep.subr.bf16.mxu0 0
    %523 = vmatpush1.bf16.msra.mxu0 %v158
    %524 = vmatprep.subr.bf16.mxu0 0
    %525 = vmatpush2.bf16.msra.mxu0 0
    %526 = vmatprep.subr.bf16.mxu0 0
    %527 = vmatpush2.bf16.msra.mxu0 0
    %528 = vmatprep.subr.bf16.mxu0 0
    %529 = vmatpush2.bf16.msra.mxu0 0
    %530 = vmatprep.subr.bf16.mxu0 0
    %531 = vmatpush2.bf16.msra.mxu0 0
    %532 = vmatprep.subr.bf16.mxu0 0
    %533 = vmatpush2.bf16.msra.mxu0 0
    %534 = vmatprep.subr.bf16.mxu0 0
    %535 = vmatpush2.bf16.msra.mxu0 0
    %536 = vmatprep.subr.bf16.mxu0 0
    %537 = vmatpush2.bf16.msra.mxu0 0
    %538 = vmatprep.subr.bf16.mxu0 0
    %539 = vmatpush2.bf16.msra.mxu0 0
    %540 = vmatprep.mubr.bf16.mxu0 0
    %541 = vmatmul.mubr.bf16.gmra.mxu0 %v506
    %v542 = vpop.f32.mrf.mxu0
    %v543 = vadd.f32 0.0, %v542
    %v544 = vpop.f32.mrf.mxu0
    %v545 = vpop.f32.mrf.mxu0
    %v546 = vpop.f32.mrf.mxu0
    %547 = vdwg.mxu0
    %v548 = vadd.f32 %v132, %v543
    %v549 = vxor.u32 %v548, 2147483648
    %v550 = vmul.f32 %v549, 1.442695
    %v551 = vpow.pop %v550
    %v552 = vadd.f32 %v551, 1.0
    %v553 = vrcp.pop %v552
    %v554 = vmul.f32 1.0, %v553
    %v555 = vtanh.pop %v548
    %v556 = vmul.f32 %v554, %v481
    %558 = vrot.lane.b32.xlu0 %v555, 32
    %v559 = vpop.permute.xlu0 %558
    %v561 = vmul.f32 %v554, %v559
    %563 = vrot.lane.b32.xlu0 %v561, 32
    %v564 = vpop.permute.xlu0 %563
    %v566 = vadd.f32 %v556, %v564
    %v567 = vtanh.pop %v566
    %569 = vrot.lane.b32.xlu0 %v567, 32
    %v570 = vpop.permute.xlu0 %569
    %v572 = vmul.f32 %v554, %v570
    %v573 = vsel %vm230, %v572, 0.0
    %v574 = vrot.slane %v573, 4
    %v575 = vadd.f32 %v573, %v574
    %v576 = vrot.slane %v575, 2
    %v577 = vadd.f32 %v575, %v576
    %v578 = vrot.slane %v577, 1
    %v579 = vadd.f32 %v577, %v578
    %581 = vrot.lane.b32.xlu0 %v579, 64
    %v582 = vpop.permute.xlu0 %581
    %584 = vst.msk [vmem:[#allocation2 + $0x4] sm:$0x1] %vm242, %v582
    %585 = vst.msk [vmem:[#allocation2 + $0x3] sm:$0x1] %vm244, %v582
    %v586 = vpack.c.bf16 %v572, %v572
    %588 = vrot.lane.b32.xlu0 %v586, 64
    %v589 = vpop.permute.xlu0 %588
    %v591 = vsel %vm68, %v589, 0
    %593 = vmatprep.subr.bf16.mxu0 0
    %594 = vmatpush1.bf16.msra.mxu0 0
    %595 = vmatprep.subr.bf16.mxu0 0
    %596 = vmatpush1.bf16.msra.mxu0 0
    %597 = vmatprep.subr.bf16.mxu0 0
    %598 = vmatpush1.bf16.msra.mxu0 0
    %599 = vmatprep.subr.bf16.mxu0 0
    %600 = vmatpush1.bf16.msra.mxu0 0
    %601 = vmatprep.subr.bf16.mxu0 0
    %602 = vmatpush1.bf16.msra.mxu0 0
    %603 = vmatprep.subr.bf16.mxu0 0
    %604 = vmatpush1.bf16.msra.mxu0 0
    %605 = vmatprep.subr.bf16.mxu0 0
    %606 = vmatpush1.bf16.msra.mxu0 %v159
    %607 = vmatprep.subr.bf16.mxu0 0
    %608 = vmatpush1.bf16.msra.mxu0 %v158
    %609 = vmatprep.subr.bf16.mxu0 0
    %610 = vmatpush2.bf16.msra.mxu0 0
    %611 = vmatprep.subr.bf16.mxu0 0
    %612 = vmatpush2.bf16.msra.mxu0 0
    %613 = vmatprep.subr.bf16.mxu0 0
    %614 = vmatpush2.bf16.msra.mxu0 0
    %615 = vmatprep.subr.bf16.mxu0 0
    %616 = vmatpush2.bf16.msra.mxu0 0
    %617 = vmatprep.subr.bf16.mxu0 0
    %618 = vmatpush2.bf16.msra.mxu0 0
    %619 = vmatprep.subr.bf16.mxu0 0
    %620 = vmatpush2.bf16.msra.mxu0 0
    %621 = vmatprep.subr.bf16.mxu0 0
    %622 = vmatpush2.bf16.msra.mxu0 0
    %623 = vmatprep.subr.bf16.mxu0 0
    %624 = vmatpush2.bf16.msra.mxu0 0
    %625 = vmatprep.mubr.bf16.mxu0 0
    %626 = vmatmul.mubr.bf16.gmra.mxu0 %v591
    %v627 = vpop.f32.mrf.mxu0
    %v628 = vadd.f32 0.0, %v627
    %v629 = vpop.f32.mrf.mxu0
    %v630 = vpop.f32.mrf.mxu0
    %v631 = vpop.f32.mrf.mxu0
    %632 = vdwg.mxu0
    %v633 = vadd.f32 %v135, %v628
    %v634 = vxor.u32 %v633, 2147483648
    %v635 = vmul.f32 %v634, 1.442695
    %v636 = vpow.pop %v635
    %v637 = vadd.f32 %v636, 1.0
    %v638 = vrcp.pop %v637
    %v639 = vmul.f32 1.0, %v638
    %v640 = vtanh.pop %v633
    %v641 = vmul.f32 %v639, %v566
    %643 = vrot.lane.b32.xlu0 %v640, 32
    %v644 = vpop.permute.xlu0 %643
    %v646 = vmul.f32 %v639, %v644
    %648 = vrot.lane.b32.xlu0 %v646, 32
    %v649 = vpop.permute.xlu0 %648
    %v651 = vadd.f32 %v641, %v649
    %v652 = vtanh.pop %v651
    %654 = vrot.lane.b32.xlu0 %v652, 32
    %v655 = vpop.permute.xlu0 %654
    %v657 = vmul.f32 %v639, %v655
    %v658 = vsel %vm230, %v657, 0.0
    %v659 = vrot.slane %v658, 4
    %v660 = vadd.f32 %v658, %v659
    %v661 = vrot.slane %v660, 2
    %v662 = vadd.f32 %v660, %v661
    %v663 = vrot.slane %v662, 1
    %v664 = vadd.f32 %v662, %v663
    %666 = vrot.lane.b32.xlu0 %v664, 64
    %v667 = vpop.permute.xlu0 %666
    %669 = vst.msk [vmem:[#allocation2 + $0x5] sm:$0x1] %vm242, %v667
    %670 = vst.msk [vmem:[#allocation2 + $0x2] sm:$0x1] %vm244, %v667
    %v671 = vpack.c.bf16 %v657, %v657
    %673 = vrot.lane.b32.xlu0 %v671, 64
    %v674 = vpop.permute.xlu0 %673
    %v676 = vsel %vm68, %v674, 0
    %678 = vmatprep.subr.bf16.mxu0 0
    %679 = vmatpush1.bf16.msra.mxu0 0
    %680 = vmatprep.subr.bf16.mxu0 0
    %681 = vmatpush1.bf16.msra.mxu0 0
    %682 = vmatprep.subr.bf16.mxu0 0
    %683 = vmatpush1.bf16.msra.mxu0 0
    %684 = vmatprep.subr.bf16.mxu0 0
    %685 = vmatpush1.bf16.msra.mxu0 0
    %686 = vmatprep.subr.bf16.mxu0 0
    %687 = vmatpush1.bf16.msra.mxu0 0
    %688 = vmatprep.subr.bf16.mxu0 0
    %689 = vmatpush1.bf16.msra.mxu0 0
    %690 = vmatprep.subr.bf16.mxu0 0
    %691 = vmatpush1.bf16.msra.mxu0 %v159
    %692 = vmatprep.subr.bf16.mxu0 0
    %693 = vmatpush1.bf16.msra.mxu0 %v158
    %694 = vmatprep.subr.bf16.mxu0 0
    %695 = vmatpush2.bf16.msra.mxu0 0
    %696 = vmatprep.subr.bf16.mxu0 0
    %697 = vmatpush2.bf16.msra.mxu0 0
    %698 = vmatprep.subr.bf16.mxu0 0
    %699 = vmatpush2.bf16.msra.mxu0 0
    %700 = vmatprep.subr.bf16.mxu0 0
    %701 = vmatpush2.bf16.msra.mxu0 0
    %702 = vmatprep.subr.bf16.mxu0 0
    %703 = vmatpush2.bf16.msra.mxu0 0
    %704 = vmatprep.subr.bf16.mxu0 0
    %705 = vmatpush2.bf16.msra.mxu0 0
    %706 = vmatprep.subr.bf16.mxu0 0
    %707 = vmatpush2.bf16.msra.mxu0 0
    %708 = vmatprep.subr.bf16.mxu0 0
    %709 = vmatpush2.bf16.msra.mxu0 0
    %710 = vmatprep.mubr.bf16.mxu0 0
    %711 = vmatmul.mubr.bf16.gmra.mxu0 %v676
    %v712 = vpop.f32.mrf.mxu0
    %v713 = vadd.f32 0.0, %v712
    %v714 = vpop.f32.mrf.mxu0
    %v715 = vpop.f32.mrf.mxu0
    %v716 = vpop.f32.mrf.mxu0
    %717 = vdwg.mxu0
    %v718 = vadd.f32 %v140, %v713
    %v719 = vxor.u32 %v718, 2147483648
    %v720 = vmul.f32 %v719, 1.442695
    %v721 = vpow.pop %v720
    %v722 = vadd.f32 %v721, 1.0
    %v723 = vrcp.pop %v722
    %v724 = vmul.f32 1.0, %v723
    %v725 = vtanh.pop %v718
    %v726 = vmul.f32 %v724, %v651
    %728 = vrot.lane.b32.xlu0 %v725, 32
    %v729 = vpop.permute.xlu0 %728
    %v731 = vmul.f32 %v724, %v729
    %733 = vrot.lane.b32.xlu0 %v731, 32
    %v734 = vpop.permute.xlu0 %733
    %v736 = vadd.f32 %v726, %v734
    %v737 = vtanh.pop %v736
    %739 = vrot.lane.b32.xlu0 %v737, 32
    %v740 = vpop.permute.xlu0 %739
    %v742 = vmul.f32 %v724, %v740
    %v743 = vsel %vm230, %v742, 0.0
    %v744 = vrot.slane %v743, 4
    %v745 = vadd.f32 %v743, %v744
    %v746 = vrot.slane %v745, 2
    %v747 = vadd.f32 %v745, %v746
    %v748 = vrot.slane %v747, 1
    %v749 = vadd.f32 %v747, %v748
    %751 = vrot.lane.b32.xlu0 %v749, 64
    %v752 = vpop.permute.xlu0 %751
    %754 = vst.msk [vmem:[#allocation2 + $0x6] sm:$0x1] %vm242, %v752
    %755 = vst.msk [vmem:[#allocation2 + $0x1] sm:$0x1] %vm244, %v752
    %v756 = vpack.c.bf16 %v742, %v742
    %758 = vrot.lane.b32.xlu0 %v756, 64
    %v759 = vpop.permute.xlu0 %758
    %v761 = vsel %vm68, %v759, 0
    %763 = vmatprep.subr.bf16.mxu0 0
    %764 = vmatpush1.bf16.msra.mxu0 0
    %765 = vmatprep.subr.bf16.mxu0 0
    %766 = vmatpush1.bf16.msra.mxu0 0
    %767 = vmatprep.subr.bf16.mxu0 0
    %768 = vmatpush1.bf16.msra.mxu0 0
    %769 = vmatprep.subr.bf16.mxu0 0
    %770 = vmatpush1.bf16.msra.mxu0 0
    %771 = vmatprep.subr.bf16.mxu0 0
    %772 = vmatpush1.bf16.msra.mxu0 0
    %773 = vmatprep.subr.bf16.mxu0 0
    %774 = vmatpush1.bf16.msra.mxu0 0
    %775 = vmatprep.subr.bf16.mxu0 0
    %776 = vmatpush1.bf16.msra.mxu0 %v159
    %777 = vmatprep.subr.bf16.mxu0 0
    %778 = vmatpush1.bf16.msra.mxu0 %v158
    %779 = vmatprep.subr.bf16.mxu0 0
    %780 = vmatpush2.bf16.msra.mxu0 0
    %781 = vmatprep.subr.bf16.mxu0 0
    %782 = vmatpush2.bf16.msra.mxu0 0
    %783 = vmatprep.subr.bf16.mxu0 0
    %784 = vmatpush2.bf16.msra.mxu0 0
    %785 = vmatprep.subr.bf16.mxu0 0
    %786 = vmatpush2.bf16.msra.mxu0 0
    %787 = vmatprep.subr.bf16.mxu0 0
    %788 = vmatpush2.bf16.msra.mxu0 0
    %789 = vmatprep.subr.bf16.mxu0 0
    %790 = vmatpush2.bf16.msra.mxu0 0
    %791 = vmatprep.subr.bf16.mxu0 0
    %792 = vmatpush2.bf16.msra.mxu0 0
    %793 = vmatprep.subr.bf16.mxu0 0
    %794 = vmatpush2.bf16.msra.mxu0 0
    %795 = vmatprep.mubr.bf16.mxu0 0
    %796 = vmatmul.mubr.bf16.gmra.mxu0 %v761
    %v797 = vpop.f32.mrf.mxu0
    %v798 = vadd.f32 0.0, %v797
    %v799 = vpop.f32.mrf.mxu0
    %v800 = vpop.f32.mrf.mxu0
    %v801 = vpop.f32.mrf.mxu0
    %802 = vdwg.mxu0
    %v803 = vadd.f32 %v143, %v798
    %v804 = vxor.u32 %v803, 2147483648
    %v805 = vmul.f32 %v804, 1.442695
    %v806 = vpow.pop %v805
    %v807 = vadd.f32 %v806, 1.0
    %v808 = vrcp.pop %v807
    %v809 = vmul.f32 1.0, %v808
    %v810 = vtanh.pop %v803
    %v811 = vmul.f32 %v809, %v736
    %813 = vrot.lane.b32.xlu0 %v810, 32
    %v814 = vpop.permute.xlu0 %813
    %v816 = vmul.f32 %v809, %v814
    %818 = vrot.lane.b32.xlu0 %v816, 32
    %v819 = vpop.permute.xlu0 %818
    %v821 = vadd.f32 %v811, %v819
    %v822 = vtanh.pop %v821
    %824 = vrot.lane.b32.xlu0 %v822, 32
    %v825 = vpop.permute.xlu0 %824
    %v827 = vmul.f32 %v809, %v825
    %v828 = vsel %vm230, %v827, 0.0
    %v829 = vrot.slane %v828, 4
    %v830 = vadd.f32 %v828, %v829
    %v831 = vrot.slane %v830, 2
    %v832 = vadd.f32 %v830, %v831
    %v833 = vrot.slane %v832, 1
    %v834 = vadd.f32 %v832, %v833
    %836 = vrot.lane.b32.xlu0 %v834, 64
    %v837 = vpop.permute.xlu0 %836
    %839 = vst.msk [vmem:[#allocation2 + $0x7] sm:$0x1] %vm242, %v837
    %840 = vst.msk [vmem:[#allocation2] sm:$0x1] %vm244, %v837
    %v841 = vmul.f32 %v827, 0.5
    %v842 = vmul.f32 %v827, 0.70710677
    %v843 = vand.u32 2147483647, %v842
    %v844 = vmul.f32 %v843, 0.3275911
    %v845 = vadd.f32 %v844, 1.0
    %v846 = vrcp.pop %v845
    %v847 = vmul.f32 %v846, 1.0614054
    %v848 = vadd.f32 %v847, -1.4531521
    %v849 = vmul.f32 %v848, %v846
    %v850 = vadd.f32 %v849, 1.4214138
    %v851 = vmul.f32 %v850, %v846
    %v852 = vadd.f32 %v851, -0.28449672
    %v853 = vmul.f32 %v852, %v846
    %v854 = vadd.f32 %v853, 0.2548296
    %v855 = vmul.f32 %v854, %v846
    %v856 = vsub.f32 0.0, %v843
    %v857 = vmul.f32 %v856, %v843
    %v858 = vmul.f32 %v857, 1.442695
    %v859 = vpow.pop %v858
    %v860 = vmul.f32 %v855, %v859
    %v861 = vsub.f32 1.0, %v860
    %vm862 = vcmp.ge.f32.partialorder %v842, 0.0
    %v863 = vsub.f32 0.0, %v861
    %v864 = vsel %vm862, %v861, %v863
    %v865 = vadd.f32 %v864, 1.0
    %v866 = vmul.f32 %v841, %v865
    %v867 = vld [vmem:[%s4] sm:$0x1]
    %v869 = vlaneseq
    %v870 = vshrl.u32 %v869, 7
    %v871 = vsub.s32 0, %v870
    %v872 = vrot.slane %v867, %v871
    %873 = vrot.lane.b32.xlu0 %v872, 64
    %v874 = vpop.permute.xlu0 %873
    %v876 = vmul.f32 %v866, %v874
    %878 = vrot.lane.b32.xlu0 %v876, 64
    %v879 = vpop.permute.xlu0 %878
    %v881 = vsel %vm68, %v879, 0.0
    %882 = vadd.xlane.f32.xlu0 %v881
    %v883 = vpop.xlane.xlu0 %882
    %v884 = vld [vmem:[#allocation3] sm:$0x1]
    %v886 = vlaneseq
    %v887 = vshrl.u32 %v886, 7
    %v888 = vsub.s32 0, %v887
    %v889 = vrot.slane %v884, %v888
    %v891 = vadd.f32 %v883, %v889
    %vm892 = vcmask 7168
    %v893 = vsel %vm892, %v891, -inf
    %v894 = vrot.slane %v893, 4
    %v895 = vmax.f32 %v893, %v894
    %v896 = vrot.slane %v895, 2
    %v897 = vmax.f32 %v895, %v896
    %v898 = vrot.slane %v897, 1
    %v899 = vmax.f32 %v897, %v898
    %v900 = vsub.f32 %v891, %v899
    %v901 = vmul.f32 %v900, 1.442695
    %v902 = vpow.pop %v901
    %v903 = vsel %vm892, %v902, 0.0
    %v904 = vrot.slane %v903, 4
    %v905 = vadd.f32 %v903, %v904
    %v906 = vrot.slane %v905, 2
    %v907 = vadd.f32 %v905, %v906
    %v908 = vrot.slane %v907, 1
    %v909 = vadd.f32 %v907, %v908
    %v910 = vrcp.pop %v909
    %v911 = vmul.f32 %v902, %v910
    %v912 = vld [vmem:[#allocation2] sm:$0xff]
    %914 = vset.pattern.permute.xlu0 0
    %915 = vperm.xlu0 %914, %v911
    %v916 = vpop.permute.xlu0 %915
    %v918 = vmul.f32 %v916, %v912
    %v919 = vpack.c.bf16 %v918, %v918
    %v920 = vld [vmem:[%s6] sm:$0xf]
    %v921 = vld [vmem:[%s6 + $0x4] sm:$0xf]
    %v922 = vld [vmem:[%s6 + $0x8] sm:$0xf]
    %v923 = vld [vmem:[%s6 + $0xc] sm:$0xf]
    %v924 = vld [vmem:[%s7] sm:$0x1]
    %v926 = vlaneseq
    %v927 = vshrl.u32 %v926, 7
    %v928 = vsub.s32 0, %v927
    %v929 = vrot.slane %v924, %v928
    %v935 = vunpack.c.l.b16 %v920
    %v936 = vunpack.c.l.b16 %v921
    %v937 = vunpack.c.l.b16 %v922
    %v938 = vunpack.c.l.b16 %v923
    %v939 = vpack.c.b16 %v936, %v935
    %v940 = vpack.c.b16 %v938, %v937
    %v944 = vsel %vm68, %v919, 0
    %946 = vmatprep.subr.bf16.mxu0 0
    %947 = vmatpush1.bf16.msra.mxu0 0
    %948 = vmatprep.subr.bf16.mxu0 0
    %949 = vmatpush1.bf16.msra.mxu0 0
    %950 = vmatprep.subr.bf16.mxu0 0
    %951 = vmatpush1.bf16.msra.mxu0 0
    %952 = vmatprep.subr.bf16.mxu0 0
    %953 = vmatpush1.bf16.msra.mxu0 0
    %954 = vmatprep.subr.bf16.mxu0 0
    %955 = vmatpush1.bf16.msra.mxu0 0
    %956 = vmatprep.subr.bf16.mxu0 0
    %957 = vmatpush1.bf16.msra.mxu0 0
    %958 = vmatprep.subr.bf16.mxu0 0
    %959 = vmatpush1.bf16.msra.mxu0 %v940
    %960 = vmatprep.subr.bf16.mxu0 0
    %961 = vmatpush1.bf16.msra.mxu0 %v939
    %962 = vmatprep.subr.bf16.mxu0 0
    %963 = vmatpush2.bf16.msra.mxu0 0
    %964 = vmatprep.subr.bf16.mxu0 0
    %965 = vmatpush2.bf16.msra.mxu0 0
    %966 = vmatprep.subr.bf16.mxu0 0
    %967 = vmatpush2.bf16.msra.mxu0 0
    %968 = vmatprep.subr.bf16.mxu0 0
    %969 = vmatpush2.bf16.msra.mxu0 0
    %970 = vmatprep.subr.bf16.mxu0 0
    %971 = vmatpush2.bf16.msra.mxu0 0
    %972 = vmatprep.subr.bf16.mxu0 0
    %973 = vmatpush2.bf16.msra.mxu0 0
    %974 = vmatprep.subr.bf16.mxu0 0
    %975 = vmatpush2.bf16.msra.mxu0 0
    %976 = vmatprep.subr.bf16.mxu0 0
    %977 = vmatpush2.bf16.msra.mxu0 0
    %978 = vmatprep.mubr.bf16.mxu0 0
    %979 = vmatmul.mubr.bf16.gmra.mxu0 %v944
    %v980 = vpop.f32.mrf.mxu0
    %v981 = vadd.f32 %v929, %v980
    %v982 = vpop.f32.mrf.mxu0
    %v983 = vpop.f32.mrf.mxu0
    %v984 = vpop.f32.mrf.mxu0
    %985 = vdwg.mxu0
    %986 = vst [vmem:[#allocation4] sm:$0xff] %v981
    // Predicated region
    $region34: #{tpu_custom_call.1} parent=1 // pred_check
      _
    $region35: #{tpu_custom_call.1} parent=1 // pred_check_branch
      %988 = sbr.rel (0) target = $region37
    $region36: #{tpu_custom_call.1} parent=1 // pred_region
      %s990 = ssub.s32 128, 128
      %991 = vsyncadd [#allocation5], %s990
      %s993 = sshll.u32 [#allocation4], 4
      %s994 = int_to_ptr.vmem [resolvable:$true] %s993
      %996 = dma.vmem_to_hbm [thread:$0]  %s994, 128, %s8, [#allocation5]
    $region37: #{tpu_custom_call.1} parent=1 // pred_fallthru
      _
    // Predicated region
    $region38: #{tpu_custom_call.1} parent=1 // pred_check
      _
    $region39: #{tpu_custom_call.1} parent=1 // pred_check_branch
      %998 = sbr.rel (0) target = $region41
    $region40: #{tpu_custom_call.1} parent=1 // pred_region
      %999 = dma.done [#allocation5], 128
    $region41: #{tpu_custom_call.1} parent=1 // pred_fallthru
      _
    %1000 = vsyncpa [#allocation5], 1

</llo_original>
